<compile_context>
chip_gen: v6e
topology: v6e:2x2x1
jax: 0.10.0
libtpu: 0.0.40
codegen_flags: <defaults>
</compile_context>

<pallas_src>
import functools

import jax
import jax.numpy as jnp
from jax.experimental import pallas as pl
from jax.experimental.pallas import tpu as pltpu


def _round_up(a, m):
    return ((a + m - 1) // m) * m


def _vmem_limit_bytes():
    """Generation-aware scoped-VMEM limit (headroom under physical VMEM)."""
    try:
        cap = int(pltpu.get_tpu_info().vmem_capacity_bytes)
    except Exception:
        cap = 64 * 1024 * 1024
    if cap <= 0:
        cap = 64 * 1024 * 1024
    # v5e/v6e (128 MiB physical) -> 96 MiB, v7x (64 MiB physical) -> 48 MiB.
    return max(32 * 1024 * 1024, min(cap * 3 // 4, 100 * 1024 * 1024))


def _pick_c_tile(C, per_channel_bytes, budget):
    """Largest divisor of C that is <=128, sublane-friendly and fits the budget."""
    fallback = None
    for d in range(min(C, 128), 0, -1):
        if C % d:
            continue
        fits = d * per_channel_bytes <= budget
        if fits and (d == C or d % 8 == 0):
            return d
        if fits and fallback is None:
            fallback = d
    if fallback is not None:
        return fallback
    # Even one channel overflows the budget; run with c_tile=1 anyway.
    # TODO(synk): add an output-row-slab tile so scratch stops scaling with H*W.
    return 1


# ----------------------------------------------------------------------------
# Fast path: stride 1, odd k (Ho == H, Wo == W).  Flat lane-dense layout.
# ----------------------------------------------------------------------------
def _dwconv_flat_kernel(x_hbm, w_ref, col_ref, o_ref, xs_ref, sem_ref,
                        *, k, p, W, L, base, c_tile, n_c):
    """One (batch, channel-block) grid step; spatial plane flattened on lanes.

    x_hbm  : (B, C, L)      raw HBM ref (manual DMA)
    w_ref  : (c_tile, k*k)  normalized depthwise filter (f32)
    col_ref: (1, L)         int32 column index (j mod W) per flat output pos
    o_ref  : (c_tile, L)    flat output block
    xs_ref : (2, c_tile, Lp) double-buffered scratch; image at [base, base+L),
             the guards outside stay zero and provide the vertical halo
    sem_ref: (2,)           DMA completion semaphores
    """
    b = pl.program_id(0)
    c = pl.program_id(1)
    Lp = xs_ref.shape[-1]

    def fetch(c_idx, slot):
        return pltpu.make_async_copy(
            x_hbm.at[b, pl.ds(c_idx * c_tile, c_tile), :],
            xs_ref.at[slot, :, pl.ds(base, L)],
            sem_ref.at[slot])

    @pl.when(c == 0)
    def _prime():
        # Zero only the guards (never the interior), then start the sweep's
        # first DMA.  Runs once per channel sweep -> safe under megacore split
        # of the batch axis.
        xs_ref[:, :, pl.ds(0, base)] = jnp.zeros((2, c_tile, base), xs_ref.dtype)
        hi = Lp - (base + L)
        xs_ref[:, :, pl.ds(base + L, hi)] = jnp.zeros((2, c_tile, hi), xs_ref.dtype)
        fetch(0, 0).start()

    @pl.when(c + 1 < n_c)
    def _prefetch_next():
        fetch(c + 1, (c + 1) % 2).start()

    slot = c % 2
    fetch(c, slot).wait()

    xs = xs_ref.at[slot]                                   # (c_tile, Lp) view
    wv = w_ref[...].astype(jnp.float32)                    # (c_tile, k*k)
    col = col_ref[...]                                     # (1, L) int32

    # TODO(synk): for bf16 inputs keep an f32 copy of the slab so the per-tap
    # convert disappears (matters most on v5e's non-bf16 VPU).
    acc = jnp.zeros((c_tile, L), jnp.float32)
    for kj in range(k):                                    # static: fully unrolled
        dc = kj - p
        part = jnp.zeros((c_tile, L), jnp.float32)
        for ki in range(k):
            off = base + (ki - p) * W + dc                 # static, always >= 0
            idx = ki * k + kj
            patch = xs[:, pl.ds(off, L)].astype(jnp.float32)
            part = part + patch * wv[:, idx:idx + 1]       # (c_tile,1) lane-bcast
        # Horizontal halo: zero positions whose column falls outside [0, W).
        if dc < 0:
            part = jnp.where(col >= -dc, part, 0.0)
        elif dc > 0:
            part = jnp.where(col < W - dc, part, 0.0)
        acc = acc + part
    o_ref[...] = jnp.maximum(acc, 0.0).astype(o_ref.dtype)


def _dwconv_flat(x, w, *, k, p):
    B, C, H, W = x.shape
    L = H * W
    isz = x.dtype.itemsize

    halo = p * W + p                        # flat extent of the vertical halo
    base = _round_up(max(halo, 1), 512)     # lane-aligned DMA destination offset
    Lp = _round_up(base + L + halo, 128)

    vmem_limit = _vmem_limit_bytes()
    per_channel = 2 * Lp * isz + 2 * L * isz + 12 * L   # scratch + out bufs + f32 temps
    c_tile = _pick_c_tile(C, per_channel, int(vmem_limit * 0.6))
    n_c = C // c_tile

    x_flat = x.reshape(B, C, L)                          # free: contiguous NCHW
    wf = w.reshape(C, k * k).astype(jnp.float32)
    col = (jnp.arange(L, dtype=jnp.int32) % W).reshape(1, L)

    kernel = functools.partial(_dwconv_flat_kernel, k=k, p=p, W=W, L=L,
                               base=base, c_tile=c_tile, n_c=n_c)

    flops = 2 * k * k * B * C * L
    bytes_accessed = 2 * B * C * L * isz + C * k * k * 4 + 4 * L

    out_flat = pl.pallas_call(
        kernel,
        out_shape=jax.ShapeDtypeStruct((B, C, L), x.dtype),
        grid_spec=pltpu.PrefetchScalarGridSpec(
            num_scalar_prefetch=0,
            grid=(B, n_c),
            in_specs=[
                pl.BlockSpec(memory_space=pl.ANY),                  # x: raw HBM
                pl.BlockSpec((c_tile, k * k), lambda b, c: (c, 0)),
                pl.BlockSpec((1, L), lambda b, c: (0, 0)),
            ],
            out_specs=pl.BlockSpec((None, c_tile, L), lambda b, c: (b, c, 0)),
            scratch_shapes=[pltpu.VMEM((2, c_tile, Lp), x.dtype),
                            pltpu.SemaphoreType.DMA((2,))],
        ),
        compiler_params=pltpu.CompilerParams(
            # b independent -> "parallel" (megacore); c carries the manual DMA
            # pipeline + scratch -> "arbitrary".
            # TODO(synk): when B == 1, one v7x TensorCore idles; promote part of
            # the channel axis to a parallel axis in that case.
            dimension_semantics=("parallel", "arbitrary"),
            vmem_limit_bytes=int(vmem_limit),
        ),
        cost_estimate=pl.CostEstimate(flops=flops, transcendentals=0,
                                      bytes_accessed=bytes_accessed),
    )(x_flat, wf, col)
    return out_flat.reshape(B, C, H, W)


# ----------------------------------------------------------------------------
# General path (any stride / even k): 2-D spatial tiles, strided tap loads.
# ----------------------------------------------------------------------------
def _dwconv_simple_kernel(x_ref, w_ref, o_ref, xp_ref, *, k, s, p, H, W, Ho, Wo):
    xp_ref[...] = jnp.zeros(xp_ref.shape, xp_ref.dtype)
    xp_ref[:, p:p + H, p:p + W] = x_ref[...]
    wv = w_ref[...].astype(jnp.float32)
    c_t = o_ref.shape[0]
    acc = jnp.zeros((c_t, Ho, Wo), jnp.float32)
    for ki in range(k):
        for kj in range(k):
            if s == 1:
                patch = xp_ref[:, pl.ds(ki, Ho), pl.ds(kj, Wo)]
            else:
                patch = xp_ref[:, pl.ds(ki, Ho, stride=s), pl.ds(kj, Wo, stride=s)]
            acc = acc + patch.astype(jnp.float32) * wv[:, ki:ki + 1, kj:kj + 1]
    o_ref[...] = jnp.maximum(acc, 0.0).astype(o_ref.dtype)


def _dwconv_simple(x, w, *, k, s, p, Ho, Wo):
    B, C, H, W = x.shape
    isz = x.dtype.itemsize
    Hp, Wp = H + 2 * p, W + 2 * p
    vmem_limit = _vmem_limit_bytes()
    per_channel = (2 * H * W + Hp * Wp + 2 * Ho * Wo) * isz + 8 * Ho * Wo
    c_tile = _pick_c_tile(C, per_channel, int(vmem_limit * 0.6))
    kernel = functools.partial(_dwconv_simple_kernel, k=k, s=s, p=p,
                               H=H, W=W, Ho=Ho, Wo=Wo)
    # TODO(synk): make this path lane-dense too (space-to-depth per stride
    # phase) if strided depthwise convs become hot.
    return pl.pallas_call(
        kernel,
        out_shape=jax.ShapeDtypeStruct((B, C, Ho, Wo), x.dtype),
        grid_spec=pltpu.PrefetchScalarGridSpec(
            num_scalar_prefetch=0,
            grid=(B, C // c_tile),
            in_specs=[pl.BlockSpec((None, c_tile, H, W), lambda b, c: (b, c, 0, 0)),
                      pl.BlockSpec((c_tile, k, k), lambda b, c: (c, 0, 0))],
            out_specs=pl.BlockSpec((None, c_tile, Ho, Wo), lambda b, c: (b, c, 0, 0)),
            scratch_shapes=[pltpu.VMEM((c_tile, Hp, Wp), x.dtype)],
        ),
        compiler_params=pltpu.CompilerParams(
            dimension_semantics=("parallel", "parallel"),
            vmem_limit_bytes=int(vmem_limit)),
    )(x, w.astype(jnp.float32))


# ----------------------------------------------------------------------------
# Public forward matching DwConvBn.
# ----------------------------------------------------------------------------
def dwconv_bn_forward(x, v, g, *, k, s=1):
    """Forward for DwConvBn: weight_norm(depthwise Conv2d, bias=False) + ReLU.

    x: (B, C, H, W); v: (C, 1, k, k) weight_norm 'v'; g: (C,) weight_norm 'g'.
    """
    B, C, H, W = x.shape
    p = k // 2
    Ho = (H + 2 * p - k) // s + 1
    Wo = (W + 2 * p - k) // s + 1

    # Weight norm (tiny, plain-JAX glue): w = g * v / ||v||_(1,2,3).
    v32 = v.astype(jnp.float32)
    v_norm = jnp.sqrt(jnp.sum(v32 * v32, axis=(1, 2, 3), keepdims=True))
    w = (g.astype(jnp.float32).reshape(C, 1, 1, 1) * v32 / v_norm)[:, 0]  # (C, k, k)

    if s == 1 and k % 2 == 1:
        try:
            return _dwconv_flat(x, w, k=k, p=p)
        except Exception:
            # Lowering safety net: fall back to the simple path if the manual-DMA
            # flat kernel is rejected on this backend.
            pass
    return _dwconv_simple(x, w, k=k, s=s, p=p, Ho=Ho, Wo=Wo)


def _reference(x, v, g, *, k, s=1):
    """Pure-JAX reference (lax depthwise conv) for a correctness check."""
    C = x.shape[1]
    p = k // 2
    v_norm = jnp.sqrt(jnp.sum(v * v, axis=(1, 2, 3), keepdims=True))
    w = g.reshape(C, 1, 1, 1) * v / v_norm
    out = jax.lax.conv_general_dilated(
        x, w, window_strides=(s, s), padding=((p, p), (p, p)),
        dimension_numbers=("NCHW", "OIHW", "NCHW"), feature_group_count=C)
    return jnp.maximum(out, 0.0)


if __name__ == "__main__":
    B, C, H, W = 2, 4, 16, 16
    k, s = 3, 1

    key = jax.random.PRNGKey(0)
    kx, kv, kg = jax.random.split(key, 3)
    x = jax.random.normal(kx, (B, C, H, W), dtype=jnp.float32)
    # weight_norm parameters for nn.Conv2d(in_c, in_c, k, groups=in_c, bias=False)
    v = jax.random.normal(kv, (C, 1, k, k), dtype=jnp.float32) * 0.1
    g = jax.random.uniform(kg, (C,), dtype=jnp.float32, minval=0.5, maxval=1.5)

    out = dwconv_bn_forward(x, v, g, k=k, s=s)
    out = jax.block_until_ready(out)

    ref = _reference(x, v, g, k=k, s=s)
    assert out.shape == ref.shape
    assert jnp.allclose(out, ref, atol=1e-5, rtol=1e-5), "mismatch vs reference"

    print("KERNEL_OK")
</pallas_src>

<mosaic_0001>
module attributes {stable_mosaic.version = 11 : i64} {
  func.func @_dwconv_flat_kernel(%arg0: i32, %arg1: i32, %arg2: memref<2x4x256xf32, #tpu.memory_space<any>>, %arg3: memref<4x9xf32, #tpu.memory_space<vmem>>, %arg4: memref<1x256xi32, #tpu.memory_space<vmem>>, %arg5: memref<1x4x256xf32, #tpu.memory_space<vmem>>, %arg6: memref<2x4x896xf32, #tpu.memory_space<vmem>>, %arg7: memref<2x!tpu.dma_semaphore, #tpu.memory_space<semaphore_mem>>) attributes {dimension_semantics = [#tpu.dimension_semantics<parallel>, #tpu.dimension_semantics<arbitrary>], iteration_bounds = array<i64: 2, 1>, scalar_prefetch = 0 : i64, scratch_operands = 2 : i64, tpu.core_type = #tpu.core_type<tc>, window_params = [{}, {transform_indices = @transform_1, window_bounds = array<i64: 4, 9>}, {pipeline_mode = #tpu.pipeline_mode<synchronous>, transform_indices = @transform_2, window_bounds = array<i64: 1, 256>}, {transform_indices = @transform_3, window_bounds = array<i64: 1, 4, 256>}]} {
    %c0_i32 = arith.constant 0 : i32
    %0 = arith.cmpi eq, %arg1, %c0_i32 : i32
    %1 = arith.extui %0 : i1 to i32
    %c0_i32_0 = arith.constant 0 : i32
    %2 = arith.cmpi ne, %1, %c0_i32_0 : i32
    scf.if %2 {
      %cst_50 = arith.constant 0.000000e+00 : f32
      %113 = vector.broadcast %cst_50 : f32 to vector<2x4x512xf32>
      %c0_51 = arith.constant 0 : index
      %c0_52 = arith.constant 0 : index
      %c0_53 = arith.constant 0 : index
      %114 = vector.load %arg6[%c0_51, %c0_52, %c0_53] : memref<2x4x896xf32, #tpu.memory_space<vmem>>, vector<2x4x512xf32>
      tpu.vector_store %arg6[%c0_51, %c0_52, %c0_53], %113 {strides = array<i32>} : memref<2x4x896xf32, #tpu.memory_space<vmem>>, vector<2x4x512xf32>,
      %cst_54 = arith.constant 0.000000e+00 : f32
      %115 = vector.broadcast %cst_54 : f32 to vector<2x4x128xf32>
      %c0_55 = arith.constant 0 : index
      %c0_56 = arith.constant 0 : index
      %c768 = arith.constant 768 : index
      %116 = vector.load %arg6[%c0_55, %c0_56, %c768] : memref<2x4x896xf32, #tpu.memory_space<vmem>>, vector<2x4x128xf32>
      tpu.vector_store %arg6[%c0_55, %c0_56, %c768], %115 {strides = array<i32>} : memref<2x4x896xf32, #tpu.memory_space<vmem>>, vector<2x4x128xf32>,
      %c0_i32_57 = arith.constant 0 : i32
      %c0_i32_58 = arith.constant 0 : i32
      %c0_i32_59 = arith.constant 0 : i32
      %c0_i32_60 = arith.constant 0 : i32
      %117 = tpu.memref_slice %arg2[%arg0, %c0_i32_59, %c0_i32_60] : memref<2x4x256xf32, #tpu.memory_space<any>> -> memref<1x4x256xf32, #tpu.memory_space<any>>
      %118 = tpu.memref_squeeze %117 : memref<1x4x256xf32, #tpu.memory_space<any>> -> memref<4x256xf32, #tpu.memory_space<any>>
      %c0_i32_61 = arith.constant 0 : i32
      %c512_i32_62 = arith.constant 512 : i32
      %119 = tpu.memref_slice %arg6[%c0_i32_57, %c0_i32_61, %c512_i32_62] : memref<2x4x896xf32, #tpu.memory_space<vmem>> -> memref<1x4x256xf32, #tpu.memory_space<vmem>>
      %120 = tpu.memref_squeeze %119 : memref<1x4x256xf32, #tpu.memory_space<vmem>> -> memref<4x256xf32, #tpu.memory_space<vmem>>
      %121 = tpu.memref_slice %arg7[%c0_i32_58] : memref<2x!tpu.dma_semaphore, #tpu.memory_space<semaphore_mem>> -> memref<1x!tpu.dma_semaphore, #tpu.memory_space<semaphore_mem>>
      %122 = tpu.memref_squeeze %121 : memref<1x!tpu.dma_semaphore, #tpu.memory_space<semaphore_mem>> -> memref<!tpu.dma_semaphore, #tpu.memory_space<semaphore_mem>>
      tpu.enqueue_dma source(%118 : memref<4x256xf32, #tpu.memory_space<any>>) target(%120 : memref<4x256xf32, #tpu.memory_space<vmem>>) target_semaphore(%122 : memref<!tpu.dma_semaphore, #tpu.memory_space<semaphore_mem>>)
    } else {
    }
    %c1_i32 = arith.constant 1 : i32
    %3 = arith.addi %arg1, %c1_i32 : i32
    %c1_i32_1 = arith.constant 1 : i32
    %4 = arith.cmpi slt, %3, %c1_i32_1 : i32
    %5 = arith.extui %4 : i1 to i32
    %c0_i32_2 = arith.constant 0 : i32
    %6 = arith.cmpi ne, %5, %c0_i32_2 : i32
    scf.if %6 {
      %c1_i32_50 = arith.constant 1 : i32
      %113 = arith.addi %arg1, %c1_i32_50 : i32
      %c1_i32_51 = arith.constant 1 : i32
      %114 = arith.addi %arg1, %c1_i32_51 : i32
      %c2_i32_52 = arith.constant 2 : i32
      %c0_i32_53 = arith.constant 0 : i32
      %115 = arith.cmpi eq, %c2_i32_52, %c0_i32_53 : i32
      %c1_i32_54 = arith.constant 1 : i32
      %116 = arith.select %115, %c1_i32_54, %c2_i32_52 : i32
      %117 = arith.remsi %114, %116 : i32
      %c0_i32_55 = arith.constant 0 : i32
      %118 = arith.cmpi ne, %117, %c0_i32_55 : i32
      %c0_i32_56 = arith.constant 0 : i32
      %119 = arith.cmpi slt, %117, %c0_i32_56 : i32
      %c0_i32_57 = arith.constant 0 : i32
      %120 = arith.cmpi slt, %116, %c0_i32_57 : i32
      %121 = arith.xori %119, %120 : i1
      %122 = arith.andi %121, %118 : i1
      %123 = arith.addi %117, %116 : i32
      %124 = arith.select %122, %123, %117 : i32
      %c4_i32_58 = arith.constant 4 : i32
      %125 = arith.muli %113, %c4_i32_58 : i32
      %c0_i32_59 = arith.constant 0 : i32
      %126 = tpu.memref_slice %arg2[%arg0, %125, %c0_i32_59] : memref<2x4x256xf32, #tpu.memory_space<any>> -> memref<1x4x256xf32, #tpu.memory_space<any>>
      %127 = tpu.memref_squeeze %126 : memref<1x4x256xf32, #tpu.memory_space<any>> -> memref<4x256xf32, #tpu.memory_space<any>>
      %c0_i32_60 = arith.constant 0 : i32
      %c512_i32_61 = arith.constant 512 : i32
      %128 = tpu.memref_slice %arg6[%124, %c0_i32_60, %c512_i32_61] : memref<2x4x896xf32, #tpu.memory_space<vmem>> -> memref<1x4x256xf32, #tpu.memory_space<vmem>>
      %129 = tpu.memref_squeeze %128 : memref<1x4x256xf32, #tpu.memory_space<vmem>> -> memref<4x256xf32, #tpu.memory_space<vmem>>
      %130 = tpu.memref_slice %arg7[%124] : memref<2x!tpu.dma_semaphore, #tpu.memory_space<semaphore_mem>> -> memref<1x!tpu.dma_semaphore, #tpu.memory_space<semaphore_mem>>
      %131 = tpu.memref_squeeze %130 : memref<1x!tpu.dma_semaphore, #tpu.memory_space<semaphore_mem>> -> memref<!tpu.dma_semaphore, #tpu.memory_space<semaphore_mem>>
      tpu.enqueue_dma source(%127 : memref<4x256xf32, #tpu.memory_space<any>>) target(%129 : memref<4x256xf32, #tpu.memory_space<vmem>>) target_semaphore(%131 : memref<!tpu.dma_semaphore, #tpu.memory_space<semaphore_mem>>)
    } else {
    }
    %c2_i32 = arith.constant 2 : i32
    %c0_i32_3 = arith.constant 0 : i32
    %7 = arith.cmpi eq, %c2_i32, %c0_i32_3 : i32
    %c1_i32_4 = arith.constant 1 : i32
    %8 = arith.select %7, %c1_i32_4, %c2_i32 : i32
    %9 = arith.remsi %arg1, %8 : i32
    %c0_i32_5 = arith.constant 0 : i32
    %10 = arith.cmpi ne, %9, %c0_i32_5 : i32
    %c0_i32_6 = arith.constant 0 : i32
    %11 = arith.cmpi slt, %9, %c0_i32_6 : i32
    %c0_i32_7 = arith.constant 0 : i32
    %12 = arith.cmpi slt, %8, %c0_i32_7 : i32
    %13 = arith.xori %11, %12 : i1
    %14 = arith.andi %13, %10 : i1
    %15 = arith.addi %9, %8 : i32
    %16 = arith.select %14, %15, %9 : i32
    %c4_i32 = arith.constant 4 : i32
    %17 = arith.muli %arg1, %c4_i32 : i32
    %c0_i32_8 = arith.constant 0 : i32
    %18 = tpu.memref_slice %arg2[%arg0, %17, %c0_i32_8] : memref<2x4x256xf32, #tpu.memory_space<any>> -> memref<1x4x256xf32, #tpu.memory_space<any>>
    %19 = tpu.memref_squeeze %18 : memref<1x4x256xf32, #tpu.memory_space<any>> -> memref<4x256xf32, #tpu.memory_space<any>>
    %c0_i32_9 = arith.constant 0 : i32
    %c512_i32 = arith.constant 512 : i32
    %20 = tpu.memref_slice %arg6[%16, %c0_i32_9, %c512_i32] : memref<2x4x896xf32, #tpu.memory_space<vmem>> -> memref<1x4x256xf32, #tpu.memory_space<vmem>>
    %21 = tpu.memref_squeeze %20 : memref<1x4x256xf32, #tpu.memory_space<vmem>> -> memref<4x256xf32, #tpu.memory_space<vmem>>
    %22 = tpu.memref_slice %arg7[%16] : memref<2x!tpu.dma_semaphore, #tpu.memory_space<semaphore_mem>> -> memref<1x!tpu.dma_semaphore, #tpu.memory_space<semaphore_mem>>
    %23 = tpu.memref_squeeze %22 : memref<1x!tpu.dma_semaphore, #tpu.memory_space<semaphore_mem>> -> memref<!tpu.dma_semaphore, #tpu.memory_space<semaphore_mem>>
    tpu.wait_dma2 semaphore(%23 : memref<!tpu.dma_semaphore, #tpu.memory_space<semaphore_mem>>) src(%19 : memref<4x256xf32, #tpu.memory_space<any>>) dst(%21 : memref<4x256xf32, #tpu.memory_space<vmem>>)
    %c0 = arith.constant 0 : index
    %c0_10 = arith.constant 0 : index
    %24 = vector.load %arg3[%c0, %c0_10] : memref<4x9xf32, #tpu.memory_space<vmem>>, vector<4x9xf32>
    %c0_11 = arith.constant 0 : index
    %c0_12 = arith.constant 0 : index
    %25 = vector.load %arg4[%c0_11, %c0_12] : memref<1x256xi32, #tpu.memory_space<vmem>>, vector<1x256xi32>
    %cst = arith.constant 0.000000e+00 : f32
    %26 = vector.broadcast %cst : f32 to vector<4x256xf32>
    %cst_13 = arith.constant 0.000000e+00 : f32
    %27 = vector.broadcast %cst_13 : f32 to vector<4x256xf32>
    %c0_i32_14 = arith.constant 0 : i32
    %c0_i32_15 = arith.constant 0 : i32
    %28 = tpu.memref_slice %arg6[%16, %c0_i32_14, %c0_i32_15] : memref<2x4x896xf32, #tpu.memory_space<vmem>> -> memref<1x4x896xf32, #tpu.memory_space<vmem>>
    %29 = tpu.memref_squeeze %28 : memref<1x4x896xf32, #tpu.memory_space<vmem>> -> memref<4x896xf32, #tpu.memory_space<vmem>>
    %c0_16 = arith.constant 0 : index
    %c495 = arith.constant 495 : index
    %30 = vector.load %29[%c0_16, %c495] : memref<4x896xf32, #tpu.memory_space<vmem>>, vector<4x256xf32>
    %31 = vector.extract_strided_slice %24 {offsets = [0, 0], sizes = [4, 1], strides = [1, 1]} : vector<4x9xf32> to vector<4x1xf32>
    %32 = vector.broadcast %31 : vector<4x1xf32> to vector<4x256xf32>
    %33 = arith.mulf %30, %32 : vector<4x256xf32>
    %34 = arith.addf %27, %33 : vector<4x256xf32>
    %c0_i32_17 = arith.constant 0 : i32
    %c0_i32_18 = arith.constant 0 : i32
    %35 = tpu.memref_slice %arg6[%16, %c0_i32_17, %c0_i32_18] : memref<2x4x896xf32, #tpu.memory_space<vmem>> -> memref<1x4x896xf32, #tpu.memory_space<vmem>>
    %36 = tpu.memref_squeeze %35 : memref<1x4x896xf32, #tpu.memory_space<vmem>> -> memref<4x896xf32, #tpu.memory_space<vmem>>
    %c0_19 = arith.constant 0 : index
    %c511 = arith.constant 511 : index
    %37 = vector.load %36[%c0_19, %c511] : memref<4x896xf32, #tpu.memory_space<vmem>>, vector<4x256xf32>
    %38 = vector.extract_strided_slice %24 {offsets = [0, 3], sizes = [4, 1], strides = [1, 1]} : vector<4x9xf32> to vector<4x1xf32>
    %39 = vector.broadcast %38 : vector<4x1xf32> to vector<4x256xf32>
    %40 = arith.mulf %37, %39 : vector<4x256xf32>
    %41 = arith.addf %34, %40 : vector<4x256xf32>
    %c0_i32_20 = arith.constant 0 : i32
    %c0_i32_21 = arith.constant 0 : i32
    %42 = tpu.memref_slice %arg6[%16, %c0_i32_20, %c0_i32_21] : memref<2x4x896xf32, #tpu.memory_space<vmem>> -> memref<1x4x896xf32, #tpu.memory_space<vmem>>
    %43 = tpu.memref_squeeze %42 : memref<1x4x896xf32, #tpu.memory_space<vmem>> -> memref<4x896xf32, #tpu.memory_space<vmem>>
    %c0_22 = arith.constant 0 : index
    %c527 = arith.constant 527 : index
    %44 = vector.load %43[%c0_22, %c527] : memref<4x896xf32, #tpu.memory_space<vmem>>, vector<4x256xf32>
    %45 = vector.extract_strided_slice %24 {offsets = [0, 6], sizes = [4, 1], strides = [1, 1]} : vector<4x9xf32> to vector<4x1xf32>
    %46 = vector.broadcast %45 : vector<4x1xf32> to vector<4x256xf32>
    %47 = arith.mulf %44, %46 : vector<4x256xf32>
    %48 = arith.addf %41, %47 : vector<4x256xf32>
    %c1_i32_23 = arith.constant 1 : i32
    %49 = vector.broadcast %c1_i32_23 : i32 to vector<1x256xi32>
    %50 = arith.cmpi sge, %25, %49 : vector<1x256xi32>
    %cst_24 = arith.constant 0.000000e+00 : f32
    %51 = vector.shape_cast %50 : vector<1x256xi1> to vector<1x256xi1>
    %52 = vector.broadcast %51 : vector<1x256xi1> to vector<4x256xi1>
    %53 = vector.broadcast %cst_24 : f32 to vector<4x256xf32>
    %54 = arith.select %52, %48, %53 : vector<4x256xi1>, vector<4x256xf32>
    %55 = arith.addf %26, %54 : vector<4x256xf32>
    %cst_25 = arith.constant 0.000000e+00 : f32
    %56 = vector.broadcast %cst_25 : f32 to vector<4x256xf32>
    %c0_i32_26 = arith.constant 0 : i32
    %c0_i32_27 = arith.constant 0 : i32
    %57 = tpu.memref_slice %arg6[%16, %c0_i32_26, %c0_i32_27] : memref<2x4x896xf32, #tpu.memory_space<vmem>> -> memref<1x4x896xf32, #tpu.memory_space<vmem>>
    %58 = tpu.memref_squeeze %57 : memref<1x4x896xf32, #tpu.memory_space<vmem>> -> memref<4x896xf32, #tpu.memory_space<vmem>>
    %c0_28 = arith.constant 0 : index
    %c496 = arith.constant 496 : index
    %59 = vector.load %58[%c0_28, %c496] : memref<4x896xf32, #tpu.memory_space<vmem>>, vector<4x256xf32>
    %60 = vector.extract_strided_slice %24 {offsets = [0, 1], sizes = [4, 1], strides = [1, 1]} : vector<4x9xf32> to vector<4x1xf32>
    %61 = vector.broadcast %60 : vector<4x1xf32> to vector<4x256xf32>
    %62 = arith.mulf %59, %61 : vector<4x256xf32>
    %63 = arith.addf %56, %62 : vector<4x256xf32>
    %c0_i32_29 = arith.constant 0 : i32
    %c0_i32_30 = arith.constant 0 : i32
    %64 = tpu.memref_slice %arg6[%16, %c0_i32_29, %c0_i32_30] : memref<2x4x896xf32, #tpu.memory_space<vmem>> -> memref<1x4x896xf32, #tpu.memory_space<vmem>>
    %65 = tpu.memref_squeeze %64 : memref<1x4x896xf32, #tpu.memory_space<vmem>> -> memref<4x896xf32, #tpu.memory_space<vmem>>
    %c0_31 = arith.constant 0 : index
    %c512 = arith.constant 512 : index
    %66 = vector.load %65[%c0_31, %c512] : memref<4x896xf32, #tpu.memory_space<vmem>>, vector<4x256xf32>
    %67 = vector.extract_strided_slice %24 {offsets = [0, 4], sizes = [4, 1], strides = [1, 1]} : vector<4x9xf32> to vector<4x1xf32>
    %68 = vector.broadcast %67 : vector<4x1xf32> to vector<4x256xf32>
    %69 = arith.mulf %66, %68 : vector<4x256xf32>
    %70 = arith.addf %63, %69 : vector<4x256xf32>
    %c0_i32_32 = arith.constant 0 : i32
    %c0_i32_33 = arith.constant 0 : i32
    %71 = tpu.memref_slice %arg6[%16, %c0_i32_32, %c0_i32_33] : memref<2x4x896xf32, #tpu.memory_space<vmem>> -> memref<1x4x896xf32, #tpu.memory_space<vmem>>
    %72 = tpu.memref_squeeze %71 : memref<1x4x896xf32, #tpu.memory_space<vmem>> -> memref<4x896xf32, #tpu.memory_space<vmem>>
    %c0_34 = arith.constant 0 : index
    %c528 = arith.constant 528 : index
    %73 = vector.load %72[%c0_34, %c528] : memref<4x896xf32, #tpu.memory_space<vmem>>, vector<4x256xf32>
    %74 = vector.extract_strided_slice %24 {offsets = [0, 7], sizes = [4, 1], strides = [1, 1]} : vector<4x9xf32> to vector<4x1xf32>
    %75 = vector.broadcast %74 : vector<4x1xf32> to vector<4x256xf32>
    %76 = arith.mulf %73, %75 : vector<4x256xf32>
    %77 = arith.addf %70, %76 : vector<4x256xf32>
    %78 = arith.addf %55, %77 : vector<4x256xf32>
    %cst_35 = arith.constant 0.000000e+00 : f32
    %79 = vector.broadcast %cst_35 : f32 to vector<4x256xf32>
    %c0_i32_36 = arith.constant 0 : i32
    %c0_i32_37 = arith.constant 0 : i32
    %80 = tpu.memref_slice %arg6[%16, %c0_i32_36, %c0_i32_37] : memref<2x4x896xf32, #tpu.memory_space<vmem>> -> memref<1x4x896xf32, #tpu.memory_space<vmem>>
    %81 = tpu.memref_squeeze %80 : memref<1x4x896xf32, #tpu.memory_space<vmem>> -> memref<4x896xf32, #tpu.memory_space<vmem>>
    %c0_38 = arith.constant 0 : index
    %c497 = arith.constant 497 : index
    %82 = vector.load %81[%c0_38, %c497] : memref<4x896xf32, #tpu.memory_space<vmem>>, vector<4x256xf32>
    %83 = vector.extract_strided_slice %24 {offsets = [0, 2], sizes = [4, 1], strides = [1, 1]} : vector<4x9xf32> to vector<4x1xf32>
    %84 = vector.broadcast %83 : vector<4x1xf32> to vector<4x256xf32>
    %85 = arith.mulf %82, %84 : vector<4x256xf32>
    %86 = arith.addf %79, %85 : vector<4x256xf32>
    %c0_i32_39 = arith.constant 0 : i32
    %c0_i32_40 = arith.constant 0 : i32
    %87 = tpu.memref_slice %arg6[%16, %c0_i32_39, %c0_i32_40] : memref<2x4x896xf32, #tpu.memory_space<vmem>> -> memref<1x4x896xf32, #tpu.memory_space<vmem>>
    %88 = tpu.memref_squeeze %87 : memref<1x4x896xf32, #tpu.memory_space<vmem>> -> memref<4x896xf32, #tpu.memory_space<vmem>>
    %c0_41 = arith.constant 0 : index
    %c513 = arith.constant 513 : index
    %89 = vector.load %88[%c0_41, %c513] : memref<4x896xf32, #tpu.memory_space<vmem>>, vector<4x256xf32>
    %90 = vector.extract_strided_slice %24 {offsets = [0, 5], sizes = [4, 1], strides = [1, 1]} : vector<4x9xf32> to vector<4x1xf32>
    %91 = vector.broadcast %90 : vector<4x1xf32> to vector<4x256xf32>
    %92 = arith.mulf %89, %91 : vector<4x256xf32>
    %93 = arith.addf %86, %92 : vector<4x256xf32>
    %c0_i32_42 = arith.constant 0 : i32
    %c0_i32_43 = arith.constant 0 : i32
    %94 = tpu.memref_slice %arg6[%16, %c0_i32_42, %c0_i32_43] : memref<2x4x896xf32, #tpu.memory_space<vmem>> -> memref<1x4x896xf32, #tpu.memory_space<vmem>>
    %95 = tpu.memref_squeeze %94 : memref<1x4x896xf32, #tpu.memory_space<vmem>> -> memref<4x896xf32, #tpu.memory_space<vmem>>
    %c0_44 = arith.constant 0 : index
    %c529 = arith.constant 529 : index
    %96 = vector.load %95[%c0_44, %c529] : memref<4x896xf32, #tpu.memory_space<vmem>>, vector<4x256xf32>
    %97 = vector.extract_strided_slice %24 {offsets = [0, 8], sizes = [4, 1], strides = [1, 1]} : vector<4x9xf32> to vector<4x1xf32>
    %98 = vector.broadcast %97 : vector<4x1xf32> to vector<4x256xf32>
    %99 = arith.mulf %96, %98 : vector<4x256xf32>
    %100 = arith.addf %93, %99 : vector<4x256xf32>
    %c15_i32 = arith.constant 15 : i32
    %101 = vector.broadcast %c15_i32 : i32 to vector<1x256xi32>
    %102 = arith.cmpi slt, %25, %101 : vector<1x256xi32>
    %cst_45 = arith.constant 0.000000e+00 : f32
    %103 = vector.shape_cast %102 : vector<1x256xi1> to vector<1x256xi1>
    %104 = vector.broadcast %103 : vector<1x256xi1> to vector<4x256xi1>
    %105 = vector.broadcast %cst_45 : f32 to vector<4x256xf32>
    %106 = arith.select %104, %100, %105 : vector<4x256xi1>, vector<4x256xf32>
    %107 = arith.addf %78, %106 : vector<4x256xf32>
    %cst_46 = arith.constant 0.000000e+00 : f32
    %108 = vector.broadcast %cst_46 : f32 to vector<4x256xf32>
    %109 = arith.maximumf %107, %108 : vector<4x256xf32>
    %c0_47 = arith.constant 0 : index
    %c0_48 = arith.constant 0 : index
    %c0_49 = arith.constant 0 : index
    %110 = vector.load %arg5[%c0_47, %c0_48, %c0_49] : memref<1x4x256xf32, #tpu.memory_space<vmem>>, vector<1x4x256xf32>
    %111 = vector.shape_cast %110 : vector<1x4x256xf32> to vector<4x256xf32>
    %112 = vector.shape_cast %109 : vector<4x256xf32> to vector<1x4x256xf32>
    tpu.vector_store %arg5[%c0_47, %c0_48, %c0_49], %112 {strides = array<i32>} : memref<1x4x256xf32, #tpu.memory_space<vmem>>, vector<1x4x256xf32>,
    return
  }
  func.func @transform_1(%arg0: i32, %arg1: i32) -> (i32, i32) {
    %c0_i32 = arith.constant 0 : i32
    %c0_i32_0 = arith.constant 0 : i32
    return %arg1, %c0_i32 : i32, i32
  }
  func.func @transform_2(%arg0: i32, %arg1: i32) -> (i32, i32) {
    %c0_i32 = arith.constant 0 : i32
    %c0_i32_0 = arith.constant 0 : i32
    %c0_i32_1 = arith.constant 0 : i32
    return %c0_i32, %c0_i32_0 : i32, i32
  }
  func.func @transform_3(%arg0: i32, %arg1: i32) -> (i32, i32, i32) {
    %c0_i32 = arith.constant 0 : i32
    %c0_i32_0 = arith.constant 0 : i32
    return %arg0, %arg1, %c0_i32 : i32, i32, i32
  }
}

module attributes {stable_mosaic.version = 11 : i64} {
  func.func @_dwconv_simple_kernel(%arg0: i32, %arg1: i32, %arg2: memref<1x4x16x16xf32, #tpu.memory_space<vmem>>, %arg3: memref<4x3x3xf32, #tpu.memory_space<vmem>>, %arg4: memref<1x4x16x16xf32, #tpu.memory_space<vmem>>, %arg5: memref<4x18x18xf32, #tpu.memory_space<vmem>>) attributes {dimension_semantics = [#tpu.dimension_semantics<parallel>, #tpu.dimension_semantics<parallel>], iteration_bounds = array<i64: 2, 1>, scalar_prefetch = 0 : i64, scratch_operands = 1 : i64, tpu.core_type = #tpu.core_type<tc>, window_params = [{transform_indices = @transform_0, window_bounds = array<i64: 1, 4, 16, 16>}, {transform_indices = @transform_1, window_bounds = array<i64: 4, 3, 3>}, {transform_indices = @transform_2, window_bounds = array<i64: 1, 4, 16, 16>}]} {
    %cst = arith.constant 0.000000e+00 : f32
    %0 = vector.broadcast %cst : f32 to vector<4x18x18xf32>
    %c0 = arith.constant 0 : index
    %c0_0 = arith.constant 0 : index
    %c0_1 = arith.constant 0 : index
    %1 = vector.load %arg5[%c0, %c0_0, %c0_1] : memref<4x18x18xf32, #tpu.memory_space<vmem>>, vector<4x18x18xf32>
    tpu.vector_store %arg5[%c0, %c0_0, %c0_1], %0 {strides = array<i32>} : memref<4x18x18xf32, #tpu.memory_space<vmem>>, vector<4x18x18xf32>,
    %c0_2 = arith.constant 0 : index
    %c0_3 = arith.constant 0 : index
    %c0_4 = arith.constant 0 : index
    %c0_5 = arith.constant 0 : index
    %2 = vector.load %arg2[%c0_2, %c0_3, %c0_4, %c0_5] : memref<1x4x16x16xf32, #tpu.memory_space<vmem>>, vector<1x4x16x16xf32>
    %3 = vector.shape_cast %2 : vector<1x4x16x16xf32> to vector<4x16x16xf32>
    %c0_6 = arith.constant 0 : index
    %c1 = arith.constant 1 : index
    %c1_7 = arith.constant 1 : index
    %4 = vector.load %arg5[%c0_6, %c1, %c1_7] : memref<4x18x18xf32, #tpu.memory_space<vmem>>, vector<4x16x16xf32>
    tpu.vector_store %arg5[%c0_6, %c1, %c1_7], %3 {strides = array<i32>} : memref<4x18x18xf32, #tpu.memory_space<vmem>>, vector<4x16x16xf32>,
    %c0_8 = arith.constant 0 : index
    %c0_9 = arith.constant 0 : index
    %c0_10 = arith.constant 0 : index
    %5 = vector.load %arg3[%c0_8, %c0_9, %c0_10] : memref<4x3x3xf32, #tpu.memory_space<vmem>>, vector<4x3x3xf32>
    %cst_11 = arith.constant 0.000000e+00 : f32
    %6 = vector.broadcast %cst_11 : f32 to vector<4x16x16xf32>
    %c0_12 = arith.constant 0 : index
    %c0_13 = arith.constant 0 : index
    %c0_14 = arith.constant 0 : index
    %7 = vector.load %arg5[%c0_12, %c0_13, %c0_14] : memref<4x18x18xf32, #tpu.memory_space<vmem>>, vector<4x16x16xf32>
    %8 = vector.extract_strided_slice %5 {offsets = [0, 0, 0], sizes = [4, 1, 1], strides = [1, 1, 1]} : vector<4x3x3xf32> to vector<4x1x1xf32>
    %9 = vector.broadcast %8 : vector<4x1x1xf32> to vector<4x16x16xf32>
    %10 = arith.mulf %7, %9 : vector<4x16x16xf32>
    %11 = arith.addf %6, %10 : vector<4x16x16xf32>
    %c0_15 = arith.constant 0 : index
    %c0_16 = arith.constant 0 : index
    %c1_17 = arith.constant 1 : index
    %12 = vector.load %arg5[%c0_15, %c0_16, %c1_17] : memref<4x18x18xf32, #tpu.memory_space<vmem>>, vector<4x16x16xf32>
    %13 = vector.extract_strided_slice %5 {offsets = [0, 0, 1], sizes = [4, 1, 1], strides = [1, 1, 1]} : vector<4x3x3xf32> to vector<4x1x1xf32>
    %14 = vector.broadcast %13 : vector<4x1x1xf32> to vector<4x16x16xf32>
    %15 = arith.mulf %12, %14 : vector<4x16x16xf32>
    %16 = arith.addf %11, %15 : vector<4x16x16xf32>
    %c0_18 = arith.constant 0 : index
    %c0_19 = arith.constant 0 : index
    %c2 = arith.constant 2 : index
    %17 = vector.load %arg5[%c0_18, %c0_19, %c2] : memref<4x18x18xf32, #tpu.memory_space<vmem>>, vector<4x16x16xf32>
    %18 = vector.extract_strided_slice %5 {offsets = [0, 0, 2], sizes = [4, 1, 1], strides = [1, 1, 1]} : vector<4x3x3xf32> to vector<4x1x1xf32>
    %19 = vector.broadcast %18 : vector<4x1x1xf32> to vector<4x16x16xf32>
    %20 = arith.mulf %17, %19 : vector<4x16x16xf32>
    %21 = arith.addf %16, %20 : vector<4x16x16xf32>
    %c0_20 = arith.constant 0 : index
    %c1_21 = arith.constant 1 : index
    %c0_22 = arith.constant 0 : index
    %22 = vector.load %arg5[%c0_20, %c1_21, %c0_22] : memref<4x18x18xf32, #tpu.memory_space<vmem>>, vector<4x16x16xf32>
    %23 = vector.extract_strided_slice %5 {offsets = [0, 1, 0], sizes = [4, 1, 1], strides = [1, 1, 1]} : vector<4x3x3xf32> to vector<4x1x1xf32>
    %24 = vector.broadcast %23 : vector<4x1x1xf32> to vector<4x16x16xf32>
    %25 = arith.mulf %22, %24 : vector<4x16x16xf32>
    %26 = arith.addf %21, %25 : vector<4x16x16xf32>
    %c0_23 = arith.constant 0 : index
    %c1_24 = arith.constant 1 : index
    %c1_25 = arith.constant 1 : index
    %27 = vector.load %arg5[%c0_23, %c1_24, %c1_25] : memref<4x18x18xf32, #tpu.memory_space<vmem>>, vector<4x16x16xf32>
    %28 = vector.extract_strided_slice %5 {offsets = [0, 1, 1], sizes = [4, 1, 1], strides = [1, 1, 1]} : vector<4x3x3xf32> to vector<4x1x1xf32>
    %29 = vector.broadcast %28 : vector<4x1x1xf32> to vector<4x16x16xf32>
    %30 = arith.mulf %27, %29 : vector<4x16x16xf32>
    %31 = arith.addf %26, %30 : vector<4x16x16xf32>
    %c0_26 = arith.constant 0 : index
    %c1_27 = arith.constant 1 : index
    %c2_28 = arith.constant 2 : index
    %32 = vector.load %arg5[%c0_26, %c1_27, %c2_28] : memref<4x18x18xf32, #tpu.memory_space<vmem>>, vector<4x16x16xf32>
    %33 = vector.extract_strided_slice %5 {offsets = [0, 1, 2], sizes = [4, 1, 1], strides = [1, 1, 1]} : vector<4x3x3xf32> to vector<4x1x1xf32>
    %34 = vector.broadcast %33 : vector<4x1x1xf32> to vector<4x16x16xf32>
    %35 = arith.mulf %32, %34 : vector<4x16x16xf32>
    %36 = arith.addf %31, %35 : vector<4x16x16xf32>
    %c0_29 = arith.constant 0 : index
    %c2_30 = arith.constant 2 : index
    %c0_31 = arith.constant 0 : index
    %37 = vector.load %arg5[%c0_29, %c2_30, %c0_31] : memref<4x18x18xf32, #tpu.memory_space<vmem>>, vector<4x16x16xf32>
    %38 = vector.extract_strided_slice %5 {offsets = [0, 2, 0], sizes = [4, 1, 1], strides = [1, 1, 1]} : vector<4x3x3xf32> to vector<4x1x1xf32>
    %39 = vector.broadcast %38 : vector<4x1x1xf32> to vector<4x16x16xf32>
    %40 = arith.mulf %37, %39 : vector<4x16x16xf32>
    %41 = arith.addf %36, %40 : vector<4x16x16xf32>
    %c0_32 = arith.constant 0 : index
    %c2_33 = arith.constant 2 : index
    %c1_34 = arith.constant 1 : index
    %42 = vector.load %arg5[%c0_32, %c2_33, %c1_34] : memref<4x18x18xf32, #tpu.memory_space<vmem>>, vector<4x16x16xf32>
    %43 = vector.extract_strided_slice %5 {offsets = [0, 2, 1], sizes = [4, 1, 1], strides = [1, 1, 1]} : vector<4x3x3xf32> to vector<4x1x1xf32>
    %44 = vector.broadcast %43 : vector<4x1x1xf32> to vector<4x16x16xf32>
    %45 = arith.mulf %42, %44 : vector<4x16x16xf32>
    %46 = arith.addf %41, %45 : vector<4x16x16xf32>
    %c0_35 = arith.constant 0 : index
    %c2_36 = arith.constant 2 : index
    %c2_37 = arith.constant 2 : index
    %47 = vector.load %arg5[%c0_35, %c2_36, %c2_37] : memref<4x18x18xf32, #tpu.memory_space<vmem>>, vector<4x16x16xf32>
    %48 = vector.extract_strided_slice %5 {offsets = [0, 2, 2], sizes = [4, 1, 1], strides = [1, 1, 1]} : vector<4x3x3xf32> to vector<4x1x1xf32>
    %49 = vector.broadcast %48 : vector<4x1x1xf32> to vector<4x16x16xf32>
    %50 = arith.mulf %47, %49 : vector<4x16x16xf32>
    %51 = arith.addf %46, %50 : vector<4x16x16xf32>
    %cst_38 = arith.constant 0.000000e+00 : f32
    %52 = vector.broadcast %cst_38 : f32 to vector<4x16x16xf32>
    %53 = arith.maximumf %51, %52 : vector<4x16x16xf32>
    %c0_39 = arith.constant 0 : index
    %c0_40 = arith.constant 0 : index
    %c0_41 = arith.constant 0 : index
    %c0_42 = arith.constant 0 : index
    %54 = vector.load %arg4[%c0_39, %c0_40, %c0_41, %c0_42] : memref<1x4x16x16xf32, #tpu.memory_space<vmem>>, vector<1x4x16x16xf32>
    %55 = vector.shape_cast %54 : vector<1x4x16x16xf32> to vector<4x16x16xf32>
    %56 = vector.shape_cast %53 : vector<4x16x16xf32> to vector<1x4x16x16xf32>
    tpu.vector_store %arg4[%c0_39, %c0_40, %c0_41, %c0_42], %56 {strides = array<i32>} : memref<1x4x16x16xf32, #tpu.memory_space<vmem>>, vector<1x4x16x16xf32>,
    return
  }
  func.func @transform_0(%arg0: i32, %arg1: i32) -> (i32, i32, i32, i32) {
    %c0_i32 = arith.constant 0 : i32
    %c0_i32_0 = arith.constant 0 : i32
    %c0_i32_1 = arith.constant 0 : i32
    return %arg0, %arg1, %c0_i32, %c0_i32_0 : i32, i32, i32, i32
  }
  func.func @transform_1(%arg0: i32, %arg1: i32) -> (i32, i32, i32) {
    %c0_i32 = arith.constant 0 : i32
    %c0_i32_0 = arith.constant 0 : i32
    %c0_i32_1 = arith.constant 0 : i32
    return %arg1, %c0_i32, %c0_i32_0 : i32, i32, i32
  }
  func.func @transform_2(%arg0: i32, %arg1: i32) -> (i32, i32, i32, i32) {
    %c0_i32 = arith.constant 0 : i32
    %c0_i32_0 = arith.constant 0 : i32
    %c0_i32_1 = arith.constant 0 : i32
    return %arg0, %arg1, %c0_i32, %c0_i32_0 : i32, i32, i32, i32
  }
}

</mosaic_0001>

<llo_original>
// kernel: tpu_custom_call.1
$region0: #{tpu_custom_call.1}
  #allocation0 [shape = 'u32[]', space=smem, size = 0x4, offset = 0x4, fixed_abs, tag = 'smem constant byte address 0x4 - core index']
  #allocation1 [shape = 'u32[144,128]{1,0:T(1,128)}', space=vmem, size = 0x12000, scoped, tag = 'internal scratch']
  #allocation2 [shape = 'f32[2,4,896]{2,1,0:T(4,128)}', space=vmem, size = 0x7000, scoped, tag = 'scratch operand']
  #allocation3 [shape = 's32[2]{0}', space=sflag, size = 0x8, scoped, tag = 'scratch operand']
  #allocation8 [shape = 's32[]', space=sflag, size = 0x4, offset = 0, fixed_abs, tag = 'sflag constant byte address 0x0 - dummy sync flag']
  #allocation9 [shape = 's32[]', space=sflag, size = 0x4, offset = 0, fixed_abs, tag = 'sflag constant byte address 0x0 - dummy sync flag']
  #allocation10 [shape = 'u32[]', space=smem, size = 0x4, offset = 0x44, fixed_abs, tag = 'smem constant byte address 0x44 - assertion arg 0']
  #allocation11 [shape = 'u32[]', space=smem, size = 0x4, offset = 0x48, fixed_abs, tag = 'smem constant byte address 0x48 - assertion arg 1']
  #allocation12 [shape = 's32[]', space=sflag, size = 0x4, offset = 0, fixed_abs, tag = 'sflag constant byte address 0x0 - dummy sync flag']
  #allocation13 [shape = 's32[]', space=sflag, size = 0x4, offset = 0, fixed_abs, tag = 'sflag constant byte address 0x0 - dummy sync flag']
  %s0 = inlined_call_operand.hbm [shape: f32[2,4,256], index: 0, kind: input, shape index: {}]
  %s1 = inlined_call_operand.hbm [shape: f32[4,9], index: 1, kind: input, shape index: {}]
  %s2 = inlined_call_operand.vmem [shape: s32[1,256], index: 2, kind: input, shape index: {}]
  %s3 = inlined_call_operand.hbm [shape: f32[2,4,256], index: 3, kind: output, shape index: {}]
  %s4 = sld [smem:[#allocation0]]
  $region61: #{tpu_custom_call.1} parent=0
    _
  %s6 = ssub.s32 1, %s4
  %s7 = scalar_select 0, %s6, %s4
  $region1: #{tpu_custom_call.1} parent=0
    #allocation4 [shape = 'u8[2048]{0}', space=vmem, size = 0x800, scoped, tag = 'input window, operand 1, single buffered']
    #allocation5 [shape = 's32[2]{0}', space=sflag, size = 0x8, scoped, tag = 'scoped memory for tpu_custom_call.1']
    #allocation6 [shape = 's32[2]{0}', space=sflag, size = 0x8, scoped, tag = 'scoped memory for tpu_custom_call.1']
    #allocation7 [shape = 'u8[8192]{0}', space=vmem, size = 0x2000, scoped, tag = 'output window, operand 0']
    %8 = vsyncpa [#allocation5], 0
    %9 = vsyncpa [#allocation6], 0
    %s10 = scalar_lea.sflag [#allocation6], 1
    %11 = vsyncpa %s10, 0
    loop: start=0, step=1, limit=4
    $region2: #{tpu_custom_call.1} parent=1 // loop_pre_header
      _
    $region3: #{tpu_custom_call.1} parent=1 // loop_header
      %s13 = sphi 0, %s17
      %p14 = scmp.ge.s32.totalorder %s13, 4
      %s20 = sphi 0, %s32
      %s21 = sphi 0, %s28
      %s22 = sphi 0, %s20
      %s23 = sphi 0, %s21
      %s24 = sphi 0, %s22
      %s25 = sphi 0, %s23
      %s35 = sphi 0, %s37
      %s38 = sphi 0, %s35
      %s39 = sphi 0, %s38
      %s55 = sphi 0, %s39
      %s59 = sphi 0, %s59
      %s61 = sphi 0, %s59
      %s62 = sphi 0, %s61
      %s76 = sphi 0, %s62
      %s84 = sphi 0, %s86
      %s87 = sphi 0, %s84
      %s88 = sphi 0, %s87
      %s104 = sphi 0, %s88
    $region4: #{tpu_custom_call.1} parent=1 // loop_header_branch
      %16 = sbr.rel (%p14) target = $region8
    $region5: #{tpu_custom_call.1} parent=1 // loop_body
      %s18 = ssub.s32 %s13, 1
      %s19 = ssub.s32 %s13, 2
      %s26 = sadd.s32 1, %s21
      %p27 = scmp.ge.s32.totalorder %s26, 1
      %s28 = scalar_select %p27, 0, %s26
      %s29 = sadd.s32 1, %s20
      %s30 = scalar_select %p27, %s29, %s20
      %p31 = scmp.ge.s32.totalorder %s30, 2
      %s32 = scalar_select %p31, 0, %s30
      %s33 = ssub.s32 %s21, %s28
      %p34 = scmp.eq.s32.totalorder %s33, 0
      %s36 = sadd.s32 %s35, 1
      %s37 = scalar_select %p34, %s35, %s36
      %p40 = pneg %p34
      %p41 = scmp.eq.s32.totalorder %s13, 1
      %p42 = por %p40, %p41
      %p43 = scmp.ne.s32.totalorder %s35, %s38
      %p44 = scmp.eq.s32.totalorder %s13, 0
      %p45 = por %p43, %p44
      %p46 = scmp.ne.s32.totalorder %s35, %s38
      %p47 = scmp.eq.s32.totalorder %s18, 1
      %p48 = por %p46, %p47
      %p49 = scmp.ne.s32.totalorder %s38, %s39
      %p50 = scmp.eq.s32.totalorder %s18, 0
      %p51 = por %p49, %p50
      %p52 = scmp.ne.s32.totalorder %s38, %s39
      %p53 = scmp.eq.s32.totalorder %s19, 1
      %p54 = por %p52, %p53
      %p56 = scmp.ne.s32.totalorder %s39, %s55
      %p57 = scmp.eq.s32.totalorder %s19, 0
      %p58 = por %p56, %p57
      %s60 = sadd.s32 %s59, 1
      %p63 = scmp.eq.s32.totalorder %s13, 1
      %p64 = scmp.ne.s32.totalorder %s59, %s61
      %p65 = scmp.eq.s32.totalorder %s13, 0
      %p66 = por %p64, %p65
      %p67 = scmp.ne.s32.totalorder %s59, %s61
      %p68 = scmp.eq.s32.totalorder %s18, 1
      %p69 = por %p67, %p68
      %p70 = scmp.ne.s32.totalorder %s61, %s62
      %p71 = scmp.eq.s32.totalorder %s18, 0
      %p72 = por %p70, %p71
      %p73 = scmp.ne.s32.totalorder %s61, %s62
      %p74 = scmp.eq.s32.totalorder %s19, 1
      %p75 = por %p73, %p74
      %p77 = scmp.ne.s32.totalorder %s62, %s76
      %p78 = scmp.eq.s32.totalorder %s19, 0
      %p79 = por %p77, %p78
      %s80 = ssub.s32 %s20, %s32
      %s81 = ssub.s32 %s21, %s28
      %s82 = sor.u32 %s80, %s81
      %p83 = scmp.eq.s32.totalorder %s82, 0
      %s85 = sadd.s32 %s84, 1
      %s86 = scalar_select %p83, %s84, %s85
      %p89 = pneg %p83
      %p90 = scmp.eq.s32.totalorder %s13, 1
      %p91 = por %p89, %p90
      %p92 = scmp.ne.s32.totalorder %s84, %s87
      %p93 = scmp.eq.s32.totalorder %s13, 0
      %p94 = por %p92, %p93
      %p95 = scmp.ne.s32.totalorder %s84, %s87
      %p96 = scmp.eq.s32.totalorder %s18, 1
      %p97 = por %p95, %p96
      %p98 = scmp.ne.s32.totalorder %s87, %s88
      %p99 = scmp.eq.s32.totalorder %s18, 0
      %p100 = por %p98, %p99
      %p101 = scmp.ne.s32.totalorder %s87, %s88
      %p102 = scmp.eq.s32.totalorder %s19, 1
      %p103 = por %p101, %p102
      %p105 = scmp.ne.s32.totalorder %s88, %s104
      %p106 = scmp.eq.s32.totalorder %s19, 0
      %p107 = por %p105, %p106
      %p108 = scmp.le.s32.totalorder 1, %s13
      %p109 = scmp.lt.s32.totalorder %s13, 3
      %p110 = pnand %p108, %p109
      %p111 = pneg %p110
      // Predicated region
      $region9: #{tpu_custom_call.1} parent=5 // pred_check
        _
      $region10: #{tpu_custom_call.1} parent=5 // pred_check_branch
        %113 = sbr.rel (%p110) target = $region12
      $region11: #{tpu_custom_call.1} parent=5 // pred_region
        %s114 = ssub.s32 %s13, 1
        // Predicated region
        $region13: #{tpu_custom_call.1} parent=11 // pred_check
          %p115 = pneg %p51
        $region14: #{tpu_custom_call.1} parent=11 // pred_check_branch
          %117 = sbr.rel (%p115) target = $region16
        $region15: #{tpu_custom_call.1} parent=11 // pred_region
          %s119 = ssub.s32 64, 64
          %120 = vsyncadd [#allocation5], %s119
          %s121 = smul.addr %s23, 64
          %s122 = scalar_lea.hbm %s1, %s121
          %s124 = sshll.u32 [#allocation4], 4
          %s125 = int_to_ptr.vmem [resolvable:$true] %s124
          %127 = dma.hbm_to_vmem [thread:$0]  %s122, 64, %s125, [#allocation5]
        $region16: #{tpu_custom_call.1} parent=11 // pred_fallthru
          _
        // Predicated region
        $region17: #{tpu_custom_call.1} parent=11 // pred_check
          %p128 = pneg %p72
        $region18: #{tpu_custom_call.1} parent=11 // pred_check_branch
          %130 = sbr.rel (%p128) target = $region20
        $region19: #{tpu_custom_call.1} parent=11 // pred_region
          _
        $region20: #{tpu_custom_call.1} parent=11 // pred_fallthru
          _
      $region12: #{tpu_custom_call.1} parent=5 // pred_fallthru
        _
      %p131 = scmp.lt.s32.totalorder %s13, 2
      // Predicated region
      $region21: #{tpu_custom_call.1} parent=5 // pred_check
        %p132 = pneg %p131
      $region22: #{tpu_custom_call.1} parent=5 // pred_check_branch
        %134 = sbr.rel (%p132) target = $region24
      $region23: #{tpu_custom_call.1} parent=5 // pred_region
        _
      $region24: #{tpu_custom_call.1} parent=5 // pred_fallthru
        _
      %p135 = scmp.le.s32.totalorder 1, %s13
      %p136 = scmp.lt.s32.totalorder %s13, 3
      %p137 = pnand %p135, %p136
      %p138 = pneg %p137
      // Predicated region
      $region25: #{tpu_custom_call.1} parent=5 // pred_check
        _
      $region26: #{tpu_custom_call.1} parent=5 // pred_check_branch
        %140 = sbr.rel (%p137) target = $region28
      $region27: #{tpu_custom_call.1} parent=5 // pred_region
        %s141 = ssub.s32 %s13, 1
        // Predicated region
        $region29: #{tpu_custom_call.1} parent=27 // pred_check
          %p142 = pneg %p51
        $region30: #{tpu_custom_call.1} parent=27 // pred_check_branch
          %144 = sbr.rel (%p142) target = $region32
        $region31: #{tpu_custom_call.1} parent=27 // pred_region
          %145 = dma.done [#allocation5], 64
        $region32: #{tpu_custom_call.1} parent=27 // pred_fallthru
          _
        %p146 = pneg %p51
        %p147 = pneg %p48
        %p148 = pneg %p72
        %p149 = pneg %p69
        %p150 = pneg %p100
        %p151 = pneg %p97
        %s152 = sand.u32 %s87, 1
        %s153 = scalar_lea.sflag [#allocation6], %s152
        %s154 = sand.u32 %s87, 1
        %s155 = smul.addr %s154, 8
        %s156 = scalar_lea.vmem [#allocation7], %s155
        %p157 = scmp.eq.s32.totalorder %s23, 0
        // Predicated region
        $region33: #{tpu_custom_call.1} parent=27 // pred_check
          %p158 = pneg %p157
        $region34: #{tpu_custom_call.1} parent=27 // pred_check_branch
          %160 = sbr.rel (%p158) target = $region36
        $region35: #{tpu_custom_call.1} parent=27 // pred_region
          %161 = vst [vmem:[#allocation2] sm:$0xff] 0.0
          %162 = vst [vmem:[#allocation2 + $0x8] sm:$0xff] 0.0
          %163 = vst [vmem:[#allocation2 + $0x1c] sm:$0xff] 0.0
          %164 = vst [vmem:[#allocation2 + $0x24] sm:$0xff] 0.0
          %165 = vst [vmem:[#allocation2 + $0x18] sm:$0xf] 0.0
          %166 = vst [vmem:[#allocation2 + $0x34] sm:$0xf] 0.0
          %s167 = smul.u32 %s22, 2
          %s168 = smul.addr %s167, 64
          %s169 = scalar_lea.hbm %s0, %s168
          %s170 = scalar_lea.vmem [#allocation2], 16
          // Predicated region
          $region37: #{tpu_custom_call.1} parent=35 // pred_check
            _
          $region38: #{tpu_custom_call.1} parent=35 // pred_check_branch
            %172 = sbr.rel target = $region40
          $region39: #{tpu_custom_call.1} parent=35 // pred_region
            %173 = sst [smem:[#allocation10]] [#allocation9]
            %174 = sst [smem:[#allocation11]] [#allocation8]
          $region40: #{tpu_custom_call.1} parent=35 // pred_fallthru
            _
          %176 = shalt.err (0)
          %s178 = sshll.u32 %s170, 4
          %s179 = int_to_ptr.vmem [resolvable:$true] %s178
          %181 = dma.hbm_to_vmem [thread:$0]  %s169, 128, %s179, [#allocation3]
        $region36: #{tpu_custom_call.1} parent=27 // pred_fallthru
          _
        %s182 = sadd.s32 %s23, 1
        %p183 = scmp.lt.s32.totalorder %s182, 1
        // Predicated region
        $region41: #{tpu_custom_call.1} parent=27 // pred_check
          %p184 = pneg %p183
        $region42: #{tpu_custom_call.1} parent=27 // pred_check_branch
          %186 = sbr.rel (%p184) target = $region44
        $region43: #{tpu_custom_call.1} parent=27 // pred_region
          %p187 = scmp.lt.s32.totalorder %s182, 0
          %s188 = ssub.s32 0, %s182
          %s189 = scalar_select %p187, %s188, %s182
          %s190 = sand.u32 %s189, 1
          %s191 = ssub.s32 0, %s190
          %s192 = scalar_select %p187, %s191, %s190
          %p193 = scmp.ne.s32.totalorder %s192, 0
          %p194 = scmp.lt.s32.totalorder %s192, 0
          %p195 = pnand %p194, %p193
          %p196 = pneg %p195
          %s197 = sadd.s32 %s192, 2
          %s198 = scalar_select %p196, %s197, %s192
          %s199 = smul.u32 %s182, 4
          %s200 = sshra.s32 %s199, 2
          %s201 = sand.u32 %s199, 3
          %s202 = smul.u32 %s200, 2
          %s203 = smul.u32 %s22, 2
          %s204 = sadd.s32 %s202, %s203
          %s205 = smul.addr %s204, 64
          %s206 = scalar_lea.hbm %s0, %s205
          %s207 = smul.u32 %s198, 7
          %s208 = sadd.s32 4, %s207
          %s209 = smul.addr %s208, 4
          %s210 = scalar_lea.vmem [#allocation2], %s209
          %s211 = scalar_lea.sflag [#allocation3], %s198
          // Predicated region
          $region45: #{tpu_custom_call.1} parent=43 // pred_check
            _
          $region46: #{tpu_custom_call.1} parent=43 // pred_check_branch
            %213 = sbr.rel target = $region48
          $region47: #{tpu_custom_call.1} parent=43 // pred_region
            %214 = sst [smem:[#allocation10]] [#allocation13]
            %215 = sst [smem:[#allocation11]] [#allocation12]
          $region48: #{tpu_custom_call.1} parent=43 // pred_fallthru
            _
          %217 = shalt.err (0)
          %s219 = sshll.u32 %s210, 4
          %s220 = int_to_ptr.vmem [resolvable:$true] %s219
          %222 = dma.hbm_to_vmem [thread:$0]  %s206, 128, %s220, %s211
        $region44: #{tpu_custom_call.1} parent=27 // pred_fallthru
          _
        %p223 = scmp.lt.s32.totalorder %s23, 0
        %s224 = ssub.s32 0, %s23
        %s225 = scalar_select %p223, %s224, %s23
        %s226 = sand.u32 %s225, 1
        %s227 = ssub.s32 0, %s226
        %s228 = scalar_select %p223, %s227, %s226
        %p229 = scmp.ne.s32.totalorder %s228, 0
        %p230 = scmp.lt.s32.totalorder %s228, 0
        %p231 = pnand %p230, %p229
        %p232 = pneg %p231
        %s233 = sadd.s32 %s228, 2
        %s234 = scalar_select %p232, %s233, %s228
        %s235 = scalar_lea.sflag [#allocation3], %s234
        %s236 = smul.u32 4, 1
        %s237 = smul.u32 %s236, 2
        %s238 = sshll.u32 %s237, 4
        %239 = dma.done %s235, %s238
        %v240 = vld [vmem:[#allocation4] sm:$0xf]
        %v241 = vld [vmem:[%s2] sm:$0x3]
        %s242 = smul.u32 %s234, 7
        %s243 = smul.addr %s242, 4
        %s244 = scalar_lea.vmem [#allocation2], %s243
        %v245 = vld [vmem:[%s244 + $0xc] sm:$0xff]
        %v246 = vld [vmem:[%s244 + $0x14] sm:$0xf]
        %248 = vset.pattern.permute.xlu0 0
        %249 = vperm.xlu0 %248, %v240
        %v250 = vpop.permute.xlu0 %249
        %v252 = vunpack.c.l.s4 839922192
        %v253 = vunpack.c.0.s8 %v252
        %v254 = vlaneseq
        %v255 = vshrl.u32 %v254, 7
        %v256 = vsub.s32 %v253, %v255
        %v257 = vrot.slane %v250, %v256
        %v259 = vmul.f32 %v245, %v257
        %v260 = vmul.f32 %v246, %v257
        %v261 = vadd.f32 %v259, 0.0
        %v262 = vadd.f32 %v260, 0.0
        %263 = vset.pattern.permute.xlu0 3
        %264 = vperm.xlu0 %263, %v240
        %v265 = vpop.permute.xlu0 %264
        %v267 = vunpack.c.l.s4 839922192
        %v268 = vunpack.c.0.s8 %v267
        %v269 = vlaneseq
        %v270 = vshrl.u32 %v269, 7
        %v271 = vsub.s32 %v268, %v270
        %v272 = vrot.slane %v265, %v271
        %v274 = vmul.f32 %v245, %v272
        %v275 = vmul.f32 %v246, %v272
        %278 = vrot.lane.b32.xlu0 %v274, 112
        %v279 = vpop.permute.xlu0 %278
        %280 = vrot.lane.b32.xlu0 %v275, 112
        %v281 = vpop.permute.xlu0 %280
        %v282 = vrot.slane %v279, 4
        %v283 = vrot.slane %v281, 4
        %vm284 = vcmask 1043456
        %v285 = vsel %vm284, %v282, %v283
        %vm286 = vcmask 916480
        %v287 = vsel %vm286, %v279, %v285
        %v290 = vadd.f32 %v261, %v287
        %v291 = vadd.f32 %v262, %v281
        %v292 = vld [vmem:[%s244 + $0x10] sm:$0xff]
        %v293 = vld [vmem:[%s244 + $0x18] sm:$0xf]
        %294 = vset.pattern.permute.xlu0 6
        %295 = vperm.xlu0 %294, %v240
        %v296 = vpop.permute.xlu0 %295
        %v298 = vunpack.c.l.s4 839922192
        %v299 = vunpack.c.0.s8 %v298
        %v300 = vlaneseq
        %v301 = vshrl.u32 %v300, 7
        %v302 = vsub.s32 %v299, %v301
        %v303 = vrot.slane %v296, %v302
        %v305 = vmul.f32 %v292, %v303
        %v306 = vmul.f32 %v293, %v303
        %309 = vrot.lane.b32.xlu0 %v305, 96
        %v310 = vpop.permute.xlu0 %309
        %311 = vrot.lane.b32.xlu0 %v306, 96
        %v312 = vpop.permute.xlu0 %311
        %v313 = vrot.slane %v310, 4
        %vm314 = vcmask 785408
        %v315 = vsel %vm314, %v313, %v310
        %v316 = vsel %vm314, %v313, %v312
        %v319 = vadd.f32 %v290, %v315
        %v320 = vadd.f32 %v291, %v316
        %vm321 = vcmp.ge.s32.totalorder %v241, 1
        %v322 = vsel %vm321, 1, 0
        %v323 = vlaneseq
        %v324 = vshrl.u32 %v323, 7
        %v325 = vsub.s32 0, %v324
        %v326 = vrot.slane %v322, %v325
        %v327 = vlaneseq
        %v328 = vshrl.u32 %v327, 7
        %v329 = vsub.s32 1, %v328
        %v330 = vrot.slane %v322, %v329
        %vm331 = vcmp.eq.s32.totalorder %v326, 1
        %vm332 = vcmp.eq.s32.totalorder %v330, 1
        %v335 = vcombine.high %v319, %v319
        %336 = vrot.lane.b32.xlu0 %v319, 17
        %v337 = vpop.permute.xlu0 %336
        %338 = vrot.lane.b32.xlu0 %v335, 17
        %v339 = vpop.permute.xlu0 %338
        %340 = vrot.lane.b32.xlu0 %v320, 17
        %v341 = vpop.permute.xlu0 %340
        %vm342 = vcmask 138240
        %v343 = vsel %vm342, %v337, %v339
        %v344 = vsel %vm342, %v339, %v341
        %v347 = vsel %vm331, %v343, 0.0
        %v348 = vsel %vm332, %v344, 0.0
        %v349 = vadd.f32 %v347, 0.0
        %v350 = vadd.f32 %v348, 0.0
        %v351 = vld [vmem:[%s244 + $0xc] sm:$0xff]
        %v352 = vld [vmem:[%s244 + $0x14] sm:$0xf]
        %353 = vset.pattern.permute.xlu0 1
        %354 = vperm.xlu0 %353, %v240
        %v355 = vpop.permute.xlu0 %354
        %v357 = vunpack.c.l.s4 839922192
        %v358 = vunpack.c.0.s8 %v357
        %v359 = vlaneseq
        %v360 = vshrl.u32 %v359, 7
        %v361 = vsub.s32 %v358, %v360
        %v362 = vrot.slane %v355, %v361
        %v364 = vmul.f32 %v351, %v362
        %v365 = vmul.f32 %v352, %v362
        %v366 = vadd.f32 %v364, 0.0
        %v367 = vadd.f32 %v365, 0.0
        %v368 = vld [vmem:[%s244 + $0x10] sm:$0xff]
        %369 = vset.pattern.permute.xlu0 4
        %370 = vperm.xlu0 %369, %v240
        %v371 = vpop.permute.xlu0 %370
        %v373 = vunpack.c.l.s4 839922192
        %v374 = vunpack.c.0.s8 %v373
        %v375 = vlaneseq
        %v376 = vshrl.u32 %v375, 7
        %v377 = vsub.s32 %v374, %v376
        %v378 = vrot.slane %v371, %v377
        %v380 = vmul.f32 %v368, %v378
        %382 = vrot.lane.b32.xlu0 %v380, 112
        %v383 = vpop.permute.xlu0 %382
        %v384 = vrot.slane %v383, 4
        %v385 = vsel %vm286, %v384, %v383
        %v388 = vadd.f32 %v366, %v385
        %v389 = vadd.f32 %v367, %v384
        %v390 = vld [vmem:[%s244 + $0x10] sm:$0xff]
        %v391 = vld [vmem:[%s244 + $0x18] sm:$0xf]
        %392 = vset.pattern.permute.xlu0 7
        %393 = vperm.xlu0 %392, %v240
        %v394 = vpop.permute.xlu0 %393
        %v396 = vunpack.c.l.s4 839922192
        %v397 = vunpack.c.0.s8 %v396
        %v398 = vlaneseq
        %v399 = vshrl.u32 %v398, 7
        %v400 = vsub.s32 %v397, %v399
        %v401 = vrot.slane %v394, %v400
        %v403 = vmul.f32 %v390, %v401
        %v404 = vmul.f32 %v391, %v401
        %407 = vrot.lane.b32.xlu0 %v403, 96
        %v408 = vpop.permute.xlu0 %407
        %409 = vrot.lane.b32.xlu0 %v404, 96
        %v410 = vpop.permute.xlu0 %409
        %v411 = vrot.slane %v408, 4
        %v412 = vsel %vm314, %v411, %v408
        %v413 = vsel %vm314, %v411, %v410
        %v416 = vadd.f32 %v388, %v412
        %v417 = vadd.f32 %v389, %v413
        %v420 = vcombine.high %v416, %v416
        %421 = vrot.lane.b32.xlu0 %v416, 16
        %v422 = vpop.permute.xlu0 %421
        %423 = vrot.lane.b32.xlu0 %v420, 16
        %v424 = vpop.permute.xlu0 %423
        %425 = vrot.lane.b32.xlu0 %v417, 16
        %v426 = vpop.permute.xlu0 %425
        %vm427 = vcmask 130048
        %v428 = vsel %vm427, %v422, %v424
        %v429 = vsel %vm427, %v424, %v426
        %v432 = vadd.f32 %v349, %v428
        %v433 = vadd.f32 %v350, %v429
        %v434 = vld [vmem:[%s244 + $0xc] sm:$0xff]
        %v435 = vld [vmem:[%s244 + $0x14] sm:$0xf]
        %436 = vset.pattern.permute.xlu0 2
        %437 = vperm.xlu0 %436, %v240
        %v438 = vpop.permute.xlu0 %437
        %v440 = vunpack.c.l.s4 839922192
        %v441 = vunpack.c.0.s8 %v440
        %v442 = vlaneseq
        %v443 = vshrl.u32 %v442, 7
        %v444 = vsub.s32 %v441, %v443
        %v445 = vrot.slane %v438, %v444
        %v447 = vmul.f32 %v434, %v445
        %v448 = vmul.f32 %v435, %v445
        %v449 = vadd.f32 %v447, 0.0
        %v450 = vadd.f32 %v448, 0.0
        %v451 = vld [vmem:[%s244 + $0x10] sm:$0xff]
        %v452 = vld [vmem:[%s244 + $0x18] sm:$0xf]
        %453 = vset.pattern.permute.xlu0 5
        %454 = vperm.xlu0 %453, %v240
        %v455 = vpop.permute.xlu0 %454
        %v457 = vunpack.c.l.s4 839922192
        %v458 = vunpack.c.0.s8 %v457
        %v459 = vlaneseq
        %v460 = vshrl.u32 %v459, 7
        %v461 = vsub.s32 %v458, %v460
        %v462 = vrot.slane %v455, %v461
        %v464 = vmul.f32 %v451, %v462
        %v465 = vmul.f32 %v452, %v462
        %468 = vrot.lane.b32.xlu0 %v464, 112
        %v469 = vpop.permute.xlu0 %468
        %470 = vrot.lane.b32.xlu0 %v465, 112
        %v471 = vpop.permute.xlu0 %470
        %v472 = vrot.slane %v469, 4
        %v473 = vsel %vm286, %v472, %v469
        %v474 = vsel %vm286, %v472, %v471
        %v477 = vadd.f32 %v449, %v473
        %v478 = vadd.f32 %v450, %v474
        %479 = vset.pattern.permute.xlu0 8
        %480 = vperm.xlu0 %479, %v240
        %v481 = vpop.permute.xlu0 %480
        %v483 = vunpack.c.l.s4 839922192
        %v484 = vunpack.c.0.s8 %v483
        %v485 = vlaneseq
        %v486 = vshrl.u32 %v485, 7
        %v487 = vsub.s32 %v484, %v486
        %v488 = vrot.slane %v481, %v487
        %v490 = vmul.f32 %v451, %v488
        %v491 = vmul.f32 %v452, %v488
        %494 = vrot.lane.b32.xlu0 %v490, 96
        %v495 = vpop.permute.xlu0 %494
        %496 = vrot.lane.b32.xlu0 %v491, 96
        %v497 = vpop.permute.xlu0 %496
        %v498 = vrot.slane %v495, 4
        %v499 = vsel %vm314, %v498, %v495
        %v500 = vsel %vm314, %v498, %v497
        %v503 = vadd.f32 %v477, %v499
        %v504 = vadd.f32 %v478, %v500
        %vm505 = vcmp.lt.s32.totalorder %v241, 15
        %v506 = vsel %vm505, 1, 0
        %v507 = vlaneseq
        %v508 = vshrl.u32 %v507, 7
        %v509 = vsub.s32 0, %v508
        %v510 = vrot.slane %v506, %v509
        %v511 = vlaneseq
        %v512 = vshrl.u32 %v511, 7
        %v513 = vsub.s32 1, %v512
        %v514 = vrot.slane %v506, %v513
        %vm515 = vcmp.eq.s32.totalorder %v510, 1
        %vm516 = vcmp.eq.s32.totalorder %v514, 1
        %v519 = vcombine.high %v503, %v503
        %520 = vrot.lane.b32.xlu0 %v503, 15
        %v521 = vpop.permute.xlu0 %520
        %522 = vrot.lane.b32.xlu0 %v519, 15
        %v523 = vpop.permute.xlu0 %522
        %524 = vrot.lane.b32.xlu0 %v504, 15
        %v525 = vpop.permute.xlu0 %524
        %vm526 = vcmask 121856
        %v527 = vsel %vm526, %v521, %v523
        %v528 = vsel %vm526, %v523, %v525
        %v531 = vsel %vm515, %v527, 0.0
        %v532 = vsel %vm516, %v528, 0.0
        %v533 = vadd.f32 %v432, %v531
        %v534 = vadd.f32 %v433, %v532
        %v535 = vmax.f32 %v533, 0.0
        %v536 = vmax.f32 %v534, 0.0
        %v539 = vcombine.low %v535, %v536
        %541 = vst [vmem:[%s156] sm:$0xff] %v539
        %s542 = sand.u32 %s87, 1
        %s543 = scalar_lea.sflag [#allocation6], %s542
        %s544 = sand.u32 %s87, 1
        %s545 = smul.addr %s544, 8
        %s546 = scalar_lea.vmem [#allocation7], %s545
        // Predicated region
        $region49: #{tpu_custom_call.1} parent=27 // pred_check
          %p547 = pneg %p97
        $region50: #{tpu_custom_call.1} parent=27 // pred_check_branch
          %549 = sbr.rel (%p547) target = $region52
        $region51: #{tpu_custom_call.1} parent=27 // pred_region
          %s551 = ssub.s32 128, 128
          %552 = vsyncadd %s543, %s551
          %s553 = smul.addr %s23, 2
          %s554 = smul.addr %s22, 2
          %s555 = sadd.s32 %s553, %s554
          %s556 = smul.addr %s555, 64
          %s557 = scalar_lea.hbm %s3, %s556
          %s559 = sshll.u32 %s546, 4
          %s560 = int_to_ptr.vmem [resolvable:$true] %s559
          %562 = dma.vmem_to_hbm [thread:$0]  %s560, 128, %s557, %s543
        $region52: #{tpu_custom_call.1} parent=27 // pred_fallthru
          _
      $region28: #{tpu_custom_call.1} parent=5 // pred_fallthru
        _
      %p563 = scmp.le.s32.totalorder 2, %s13
      // Predicated region
      $region53: #{tpu_custom_call.1} parent=5 // pred_check
        %p564 = pneg %p563
      $region54: #{tpu_custom_call.1} parent=5 // pred_check_branch
        %566 = sbr.rel (%p564) target = $region56
      $region55: #{tpu_custom_call.1} parent=5 // pred_region
        %s567 = ssub.s32 %s13, 2
        // Predicated region
        $region57: #{tpu_custom_call.1} parent=55 // pred_check
          %p568 = pneg %p103
        $region58: #{tpu_custom_call.1} parent=55 // pred_check_branch
          %570 = sbr.rel (%p568) target = $region60
        $region59: #{tpu_custom_call.1} parent=55 // pred_region
          %s571 = sand.u32 %s88, 1
          %s572 = scalar_lea.sflag [#allocation6], %s571
          %s573 = sand.u32 %s88, 1
          %s574 = smul.addr %s573, 8
          %s575 = scalar_lea.vmem [#allocation7], %s574
          %576 = dma.done %s572, 128
        $region60: #{tpu_custom_call.1} parent=55 // pred_fallthru
          _
      $region56: #{tpu_custom_call.1} parent=5 // pred_fallthru
        _
    $region6: #{tpu_custom_call.1} parent=1 // loop_footer
      %s17 = sadd.s32 1, %s13
    $region7: #{tpu_custom_call.1} parent=1 // loop_footer_branch
      %12 = sbr.rel target = $region3
    $region8: #{tpu_custom_call.1} parent=1 // loop_exit
      _
    %577 = vsyncpa [#allocation5], 1
    %s578 = scalar_lea.sflag [#allocation5], 1
    %579 = vsyncpa %s578, 1
    %580 = vsyncpa [#allocation6], 1
    %s581 = scalar_lea.sflag [#allocation6], 1
    %582 = vsyncpa %s581, 1
  %583 = vsyncmov [#allocation3]
  %s584 = vpop.sfrf %583
  %p585 = scmp.eq.s32.totalorder %s584, 0
  %p586 = pneg %p585
  %588 = shalt.err (%p586)
  %s589 = scalar_lea.sflag [#allocation3], 1
  %590 = vsyncmov %s589
  %s591 = vpop.sfrf %590
  %p592 = scmp.eq.s32.totalorder %s591, 0
  %p593 = pneg %p592
  %595 = shalt.err (%p593)

// kernel: tpu_custom_call.1
$region0: #{tpu_custom_call.1}
  #allocation0 [shape = 'u32[]', space=smem, size = 0x4, offset = 0x4, fixed_abs, tag = 'smem constant byte address 0x4 - core index']
  #allocation1 [shape = 'u32[144,128]{1,0:T(1,128)}', space=vmem, size = 0x12000, scoped, tag = 'internal scratch']
  #allocation2 [shape = 'f32[4,18,18]{2,1,0:T(8,128)}', space=vmem, size = 0xc000, scoped, tag = 'scratch operand']
  %s0 = inlined_call_operand.hbm [shape: f32[2,4,16,16], index: 0, kind: input, shape index: {}]
  %s1 = inlined_call_operand.vmem [shape: f32[4,3,3], index: 1, kind: input, shape index: {}]
  %s2 = inlined_call_operand.hbm [shape: f32[2,4,16,16], index: 2, kind: output, shape index: {}]
  %s3 = sld [smem:[#allocation0]]
  $region45: #{tpu_custom_call.1} parent=0
    _
  %s5 = ssub.s32 1, %s3
  %s6 = scalar_select 0, %s5, %s3
  $region1: #{tpu_custom_call.1} parent=0
    #allocation3 [shape = 'u8[65536]{0}', space=vmem, size = 0x10000, scoped, tag = 'input window, operand 0']
    #allocation4 [shape = 's32[2]{0}', space=sflag, size = 0x8, scoped, tag = 'scoped memory for tpu_custom_call.1']
    #allocation5 [shape = 's32[2]{0}', space=sflag, size = 0x8, scoped, tag = 'scoped memory for tpu_custom_call.1']
    #allocation6 [shape = 'u8[65536]{0}', space=vmem, size = 0x10000, scoped, tag = 'output window, operand 0']
    %7 = vsyncpa [#allocation4], 0
    %s8 = scalar_lea.sflag [#allocation4], 1
    %9 = vsyncpa %s8, 0
    %10 = vsyncpa [#allocation5], 0
    %s11 = scalar_lea.sflag [#allocation5], 1
    %12 = vsyncpa %s11, 0
    loop: start=0, step=1, limit=4
    $region2: #{tpu_custom_call.1} parent=1 // loop_pre_header
      _
    $region3: #{tpu_custom_call.1} parent=1 // loop_header
      %s14 = sphi 0, %s18
      %p15 = scmp.ge.s32.totalorder %s14, 4
      %s21 = sphi 0, %s33
      %s22 = sphi 0, %s29
      %s23 = sphi 0, %s21
      %s24 = sphi 0, %s22
      %s25 = sphi 0, %s23
      %s26 = sphi 0, %s24
      %s38 = sphi 0, %s40
      %s41 = sphi 0, %s38
      %s42 = sphi 0, %s41
      %s58 = sphi 0, %s42
      %s64 = sphi 0, %s66
      %s67 = sphi 0, %s64
      %s68 = sphi 0, %s67
      %s84 = sphi 0, %s68
      %s92 = sphi 0, %s94
      %s95 = sphi 0, %s92
      %s96 = sphi 0, %s95
      %s112 = sphi 0, %s96
    $region4: #{tpu_custom_call.1} parent=1 // loop_header_branch
      %17 = sbr.rel (%p15) target = $region8
    $region5: #{tpu_custom_call.1} parent=1 // loop_body
      %s19 = ssub.s32 %s14, 1
      %s20 = ssub.s32 %s14, 2
      %s27 = sadd.s32 1, %s22
      %p28 = scmp.ge.s32.totalorder %s27, 1
      %s29 = scalar_select %p28, 0, %s27
      %s30 = sadd.s32 1, %s21
      %s31 = scalar_select %p28, %s30, %s21
      %p32 = scmp.ge.s32.totalorder %s31, 2
      %s33 = scalar_select %p32, 0, %s31
      %s34 = ssub.s32 %s21, %s33
      %s35 = ssub.s32 %s22, %s29
      %s36 = sor.u32 %s34, %s35
      %p37 = scmp.eq.s32.totalorder %s36, 0
      %s39 = sadd.s32 %s38, 1
      %s40 = scalar_select %p37, %s38, %s39
      %p43 = pneg %p37
      %p44 = scmp.eq.s32.totalorder %s14, 1
      %p45 = por %p43, %p44
      %p46 = scmp.ne.s32.totalorder %s38, %s41
      %p47 = scmp.eq.s32.totalorder %s14, 0
      %p48 = por %p46, %p47
      %p49 = scmp.ne.s32.totalorder %s38, %s41
      %p50 = scmp.eq.s32.totalorder %s19, 1
      %p51 = por %p49, %p50
      %p52 = scmp.ne.s32.totalorder %s41, %s42
      %p53 = scmp.eq.s32.totalorder %s19, 0
      %p54 = por %p52, %p53
      %p55 = scmp.ne.s32.totalorder %s41, %s42
      %p56 = scmp.eq.s32.totalorder %s20, 1
      %p57 = por %p55, %p56
      %p59 = scmp.ne.s32.totalorder %s42, %s58
      %p60 = scmp.eq.s32.totalorder %s20, 0
      %p61 = por %p59, %p60
      %s62 = ssub.s32 %s22, %s29
      %p63 = scmp.eq.s32.totalorder %s62, 0
      %s65 = sadd.s32 %s64, 1
      %s66 = scalar_select %p63, %s64, %s65
      %p69 = pneg %p63
      %p70 = scmp.eq.s32.totalorder %s14, 1
      %p71 = por %p69, %p70
      %p72 = scmp.ne.s32.totalorder %s64, %s67
      %p73 = scmp.eq.s32.totalorder %s14, 0
      %p74 = por %p72, %p73
      %p75 = scmp.ne.s32.totalorder %s64, %s67
      %p76 = scmp.eq.s32.totalorder %s19, 1
      %p77 = por %p75, %p76
      %p78 = scmp.ne.s32.totalorder %s67, %s68
      %p79 = scmp.eq.s32.totalorder %s19, 0
      %p80 = por %p78, %p79
      %p81 = scmp.ne.s32.totalorder %s67, %s68
      %p82 = scmp.eq.s32.totalorder %s20, 1
      %p83 = por %p81, %p82
      %p85 = scmp.ne.s32.totalorder %s68, %s84
      %p86 = scmp.eq.s32.totalorder %s20, 0
      %p87 = por %p85, %p86
      %s88 = ssub.s32 %s21, %s33
      %s89 = ssub.s32 %s22, %s29
      %s90 = sor.u32 %s88, %s89
      %p91 = scmp.eq.s32.totalorder %s90, 0
      %s93 = sadd.s32 %s92, 1
      %s94 = scalar_select %p91, %s92, %s93
      %p97 = pneg %p91
      %p98 = scmp.eq.s32.totalorder %s14, 1
      %p99 = por %p97, %p98
      %p100 = scmp.ne.s32.totalorder %s92, %s95
      %p101 = scmp.eq.s32.totalorder %s14, 0
      %p102 = por %p100, %p101
      %p103 = scmp.ne.s32.totalorder %s92, %s95
      %p104 = scmp.eq.s32.totalorder %s19, 1
      %p105 = por %p103, %p104
      %p106 = scmp.ne.s32.totalorder %s95, %s96
      %p107 = scmp.eq.s32.totalorder %s19, 0
      %p108 = por %p106, %p107
      %p109 = scmp.ne.s32.totalorder %s95, %s96
      %p110 = scmp.eq.s32.totalorder %s20, 1
      %p111 = por %p109, %p110
      %p113 = scmp.ne.s32.totalorder %s96, %s112
      %p114 = scmp.eq.s32.totalorder %s20, 0
      %p115 = por %p113, %p114
      %p116 = scmp.le.s32.totalorder 1, %s14
      %p117 = scmp.lt.s32.totalorder %s14, 3
      %p118 = pnand %p116, %p117
      %p119 = pneg %p118
      // Predicated region
      $region9: #{tpu_custom_call.1} parent=5 // pred_check
        _
      $region10: #{tpu_custom_call.1} parent=5 // pred_check_branch
        %121 = sbr.rel (%p118) target = $region12
      $region11: #{tpu_custom_call.1} parent=5 // pred_region
        %s122 = ssub.s32 %s14, 1
        // Predicated region
        $region13: #{tpu_custom_call.1} parent=11 // pred_check
          %p123 = pneg %p80
        $region14: #{tpu_custom_call.1} parent=11 // pred_check_branch
          %125 = sbr.rel (%p123) target = $region16
        $region15: #{tpu_custom_call.1} parent=11 // pred_region
          %s126 = smul.u32 4, %s24
          %p127 = scmp.lt.s32.totalorder %s126, 3
          %s128 = scalar_select %p127, %s126, 3
          %s129 = smul.addr %s128, 4
          %s130 = scalar_lea.vmem %s1, %s129
          %s131 = smul.u32 4, %s24
        $region16: #{tpu_custom_call.1} parent=11 // pred_fallthru
          _
      $region12: #{tpu_custom_call.1} parent=5 // pred_fallthru
        _
      %p132 = scmp.lt.s32.totalorder %s14, 2
      // Predicated region
      $region17: #{tpu_custom_call.1} parent=5 // pred_check
        %p133 = pneg %p132
      $region18: #{tpu_custom_call.1} parent=5 // pred_check_branch
        %135 = sbr.rel (%p133) target = $region20
      $region19: #{tpu_custom_call.1} parent=5 // pred_region
        // Predicated region
        $region21: #{tpu_custom_call.1} parent=19 // pred_check
          %p136 = pneg %p48
        $region22: #{tpu_custom_call.1} parent=19 // pred_check_branch
          %138 = sbr.rel (%p136) target = $region24
        $region23: #{tpu_custom_call.1} parent=19 // pred_region
          %s139 = sand.u32 %s38, 1
          %s140 = scalar_lea.sflag [#allocation4], %s139
          %s141 = sand.u32 %s38, 1
          %s142 = smul.addr %s141, 64
          %s143 = scalar_lea.vmem [#allocation3], %s142
          %s144 = smul.u32 4, %s22
          %s146 = ssub.s32 1024, 1024
          %147 = vsyncadd %s140, %s146
          %s148 = smul.addr %s144, 2
          %s149 = smul.addr %s21, 8
          %s150 = sadd.s32 %s148, %s149
          %s151 = smul.addr %s150, 128
          %s152 = scalar_lea.hbm %s0, %s151
          %s153 = sshll.u32 %s143, 4
          %s154 = int_to_ptr.vmem [resolvable:$true] %s153
          %159 = dma.hbm_to_vmem [thread:$0]  %s152, 1024, %s154, %s140, 128, 128, 8
        $region24: #{tpu_custom_call.1} parent=19 // pred_fallthru
          _
      $region20: #{tpu_custom_call.1} parent=5 // pred_fallthru
        _
      %p160 = scmp.le.s32.totalorder 1, %s14
      %p161 = scmp.lt.s32.totalorder %s14, 3
      %p162 = pnand %p160, %p161
      %p163 = pneg %p162
      // Predicated region
      $region25: #{tpu_custom_call.1} parent=5 // pred_check
        _
      $region26: #{tpu_custom_call.1} parent=5 // pred_check_branch
        %165 = sbr.rel (%p162) target = $region28
      $region27: #{tpu_custom_call.1} parent=5 // pred_region
        %s166 = ssub.s32 %s14, 1
        %s167 = sand.u32 %s41, 1
        %s168 = scalar_lea.sflag [#allocation4], %s167
        %s169 = sand.u32 %s41, 1
        %s170 = smul.addr %s169, 64
        %s171 = scalar_lea.vmem [#allocation3], %s170
        // Predicated region
        $region29: #{tpu_custom_call.1} parent=27 // pred_check
          %p172 = pneg %p54
        $region30: #{tpu_custom_call.1} parent=27 // pred_check_branch
          %174 = sbr.rel (%p172) target = $region32
        $region31: #{tpu_custom_call.1} parent=27 // pred_region
          %175 = dma.done %s168, 1024
        $region32: #{tpu_custom_call.1} parent=27 // pred_fallthru
          _
        %s176 = sand.u32 %s41, 1
        %s177 = scalar_lea.sflag [#allocation4], %s176
        %s178 = sand.u32 %s41, 1
        %s179 = smul.addr %s178, 64
        %s180 = scalar_lea.vmem [#allocation3], %s179
        %p181 = pneg %p54
        %p182 = pneg %p51
        %s183 = smul.u32 4, %s24
        %p184 = scmp.lt.s32.totalorder %s183, 3
        %s185 = scalar_select %p184, %s183, 3
        %s186 = smul.addr %s185, 4
        %s187 = scalar_lea.vmem %s1, %s186
        %p188 = pneg %p80
        %p189 = pneg %p77
        %p190 = pneg %p108
        %p191 = pneg %p105
        %s192 = sand.u32 %s95, 1
        %s193 = scalar_lea.sflag [#allocation5], %s192
        %s194 = sand.u32 %s95, 1
        %s195 = smul.addr %s194, 64
        %s196 = scalar_lea.vmem [#allocation6], %s195
        %s197 = smul.u32 4, %s24
        %s198 = smul.u32 4, %s24
        %p199 = scmp.lt.s32.totalorder %s198, 3
        %s200 = scalar_select %p199, %s198, 3
        %s201 = smul.addr %s200, 4
        %s202 = scalar_lea.vmem %s1, %s201
        %s203 = smul.u32 4, %s24
        %s204 = smul.u32 4, %s24
        %vm205 = vcmask 146432
        %206 = vst.msk [vmem:[#allocation2] sm:$0xff] %vm205, 0.0
        %207 = vst.msk [vmem:[#allocation2 + $0x8] sm:$0xff] %vm205, 0.0
        %vm208 = vcmask 140288
        %209 = vst.msk [vmem:[#allocation2 + $0x10] sm:$0x3] %vm208, 0.0
        %210 = vst.msk [vmem:[#allocation2 + $0x18] sm:$0xff] %vm205, 0.0
        %211 = vst.msk [vmem:[#allocation2 + $0x20] sm:$0xff] %vm205, 0.0
        %212 = vst.msk [vmem:[#allocation2 + $0x28] sm:$0x3] %vm208, 0.0
        %213 = vst.msk [vmem:[#allocation2 + $0x30] sm:$0xff] %vm205, 0.0
        %214 = vst.msk [vmem:[#allocation2 + $0x38] sm:$0xff] %vm205, 0.0
        %215 = vst.msk [vmem:[#allocation2 + $0x40] sm:$0x3] %vm208, 0.0
        %216 = vst.msk [vmem:[#allocation2 + $0x48] sm:$0xff] %vm205, 0.0
        %217 = vst.msk [vmem:[#allocation2 + $0x50] sm:$0xff] %vm205, 0.0
        %218 = vst.msk [vmem:[#allocation2 + $0x58] sm:$0x3] %vm208, 0.0
        %v219 = vld [vmem:[%s171] sm:$0xff]
        %v220 = vld [vmem:[%s171 + $0x8] sm:$0xff]
        %v221 = vld [vmem:[%s171 + $0x10] sm:$0xff]
        %v222 = vld [vmem:[%s171 + $0x18] sm:$0xff]
        %v223 = vld [vmem:[%s171 + $0x20] sm:$0xff]
        %v224 = vld [vmem:[%s171 + $0x28] sm:$0xff]
        %v225 = vld [vmem:[%s171 + $0x30] sm:$0xff]
        %v226 = vld [vmem:[%s171 + $0x38] sm:$0xff]
        %235 = vrot.lane.b32.xlu0 %v219, 1
        %v236 = vpop.permute.xlu0 %235
        %237 = vrot.lane.b32.xlu0 %v220, 1
        %v238 = vpop.permute.xlu0 %237
        %239 = vrot.lane.b32.xlu0 %v221, 1
        %v240 = vpop.permute.xlu0 %239
        %241 = vrot.lane.b32.xlu0 %v222, 1
        %v242 = vpop.permute.xlu0 %241
        %243 = vrot.lane.b32.xlu0 %v223, 1
        %v244 = vpop.permute.xlu0 %243
        %245 = vrot.lane.b32.xlu0 %v224, 1
        %v246 = vpop.permute.xlu0 %245
        %247 = vrot.lane.b32.xlu0 %v225, 1
        %v248 = vpop.permute.xlu0 %247
        %249 = vrot.lane.b32.xlu0 %v226, 1
        %v250 = vpop.permute.xlu0 %249
        %vm259 = vcmask 138248
        %260 = vst.msk [vmem:[#allocation2 + $0x1] sm:$0xff] %vm259, %v236
        %261 = vst.msk [vmem:[#allocation2 + $0x9] sm:$0xff] %vm259, %v238
        %262 = vst.msk [vmem:[#allocation2 + $0x19] sm:$0xff] %vm259, %v240
        %263 = vst.msk [vmem:[#allocation2 + $0x21] sm:$0xff] %vm259, %v242
        %264 = vst.msk [vmem:[#allocation2 + $0x31] sm:$0xff] %vm259, %v244
        %265 = vst.msk [vmem:[#allocation2 + $0x39] sm:$0xff] %vm259, %v246
        %266 = vst.msk [vmem:[#allocation2 + $0x49] sm:$0xff] %vm259, %v248
        %267 = vst.msk [vmem:[#allocation2 + $0x51] sm:$0xff] %vm259, %v250
        %v268 = vld [vmem:[%s202] sm:$0x7]
        %v269 = vld [vmem:[%s202 + $0x4] sm:$0x7]
        %v270 = vld [vmem:[%s202 + $0x8] sm:$0x7]
        %v271 = vld [vmem:[%s202 + $0xc] sm:$0x7]
        %v272 = vld [vmem:[#allocation2] sm:$0xff]
        %v273 = vld [vmem:[#allocation2 + $0x8] sm:$0xff]
        %v274 = vld [vmem:[#allocation2 + $0x18] sm:$0xff]
        %v275 = vld [vmem:[#allocation2 + $0x20] sm:$0xff]
        %v276 = vld [vmem:[#allocation2 + $0x30] sm:$0xff]
        %v277 = vld [vmem:[#allocation2 + $0x38] sm:$0xff]
        %v278 = vld [vmem:[#allocation2 + $0x48] sm:$0xff]
        %v279 = vld [vmem:[#allocation2 + $0x50] sm:$0xff]
        %s281 = vtos %v268
        %v282 = vstv %s281
        %s285 = vtos %v269
        %v286 = vstv %s285
        %s289 = vtos %v270
        %v290 = vstv %s289
        %s293 = vtos %v271
        %v294 = vstv %s293
        %v296 = vmul.f32 %v272, %v282
        %v297 = vmul.f32 %v273, %v282
        %v298 = vmul.f32 %v274, %v286
        %v299 = vmul.f32 %v275, %v286
        %v300 = vmul.f32 %v276, %v290
        %v301 = vmul.f32 %v277, %v290
        %v302 = vmul.f32 %v278, %v294
        %v303 = vmul.f32 %v279, %v294
        %v304 = vadd.f32 %v296, 0.0
        %v305 = vadd.f32 %v297, 0.0
        %v306 = vadd.f32 %v298, 0.0
        %v307 = vadd.f32 %v299, 0.0
        %v308 = vadd.f32 %v300, 0.0
        %v309 = vadd.f32 %v301, 0.0
        %v310 = vadd.f32 %v302, 0.0
        %v311 = vadd.f32 %v303, 0.0
        %312 = vrot.lane.b32.xlu0 %v268, 127
        %v313 = vpop.permute.xlu0 %312
        %314 = vrot.lane.b32.xlu0 %v269, 127
        %v315 = vpop.permute.xlu0 %314
        %316 = vrot.lane.b32.xlu0 %v270, 127
        %v317 = vpop.permute.xlu0 %316
        %318 = vrot.lane.b32.xlu0 %v271, 127
        %v319 = vpop.permute.xlu0 %318
        %s320 = vtos %v313
        %v321 = vstv %s320
        %s323 = vtos %v315
        %v324 = vstv %s323
        %s326 = vtos %v317
        %v327 = vstv %s326
        %s329 = vtos %v319
        %v330 = vstv %s329
        %v332 = vmul.f32 %v272, %v321
        %v333 = vmul.f32 %v273, %v321
        %v334 = vmul.f32 %v274, %v324
        %v335 = vmul.f32 %v275, %v324
        %v336 = vmul.f32 %v276, %v327
        %v337 = vmul.f32 %v277, %v327
        %v338 = vmul.f32 %v278, %v330
        %v339 = vmul.f32 %v279, %v330
        %348 = vrot.lane.b32.xlu0 %v332, 127
        %v349 = vpop.permute.xlu0 %348
        %350 = vrot.lane.b32.xlu0 %v333, 127
        %v351 = vpop.permute.xlu0 %350
        %352 = vrot.lane.b32.xlu0 %v334, 127
        %v353 = vpop.permute.xlu0 %352
        %354 = vrot.lane.b32.xlu0 %v335, 127
        %v355 = vpop.permute.xlu0 %354
        %356 = vrot.lane.b32.xlu0 %v336, 127
        %v357 = vpop.permute.xlu0 %356
        %358 = vrot.lane.b32.xlu0 %v337, 127
        %v359 = vpop.permute.xlu0 %358
        %360 = vrot.lane.b32.xlu0 %v338, 127
        %v361 = vpop.permute.xlu0 %360
        %362 = vrot.lane.b32.xlu0 %v339, 127
        %v363 = vpop.permute.xlu0 %362
        %v372 = vadd.f32 %v304, %v349
        %v373 = vadd.f32 %v305, %v351
        %v374 = vadd.f32 %v306, %v353
        %v375 = vadd.f32 %v307, %v355
        %v376 = vadd.f32 %v308, %v357
        %v377 = vadd.f32 %v309, %v359
        %v378 = vadd.f32 %v310, %v361
        %v379 = vadd.f32 %v311, %v363
        %380 = vrot.lane.b32.xlu0 %v268, 126
        %v381 = vpop.permute.xlu0 %380
        %382 = vrot.lane.b32.xlu0 %v269, 126
        %v383 = vpop.permute.xlu0 %382
        %384 = vrot.lane.b32.xlu0 %v270, 126
        %v385 = vpop.permute.xlu0 %384
        %386 = vrot.lane.b32.xlu0 %v271, 126
        %v387 = vpop.permute.xlu0 %386
        %s388 = vtos %v381
        %v389 = vstv %s388
        %s391 = vtos %v383
        %v392 = vstv %s391
        %s394 = vtos %v385
        %v395 = vstv %s394
        %s397 = vtos %v387
        %v398 = vstv %s397
        %v400 = vmul.f32 %v272, %v389
        %v401 = vmul.f32 %v273, %v389
        %v402 = vmul.f32 %v274, %v392
        %v403 = vmul.f32 %v275, %v392
        %v404 = vmul.f32 %v276, %v395
        %v405 = vmul.f32 %v277, %v395
        %v406 = vmul.f32 %v278, %v398
        %v407 = vmul.f32 %v279, %v398
        %416 = vrot.lane.b32.xlu0 %v400, 126
        %v417 = vpop.permute.xlu0 %416
        %418 = vrot.lane.b32.xlu0 %v401, 126
        %v419 = vpop.permute.xlu0 %418
        %420 = vrot.lane.b32.xlu0 %v402, 126
        %v421 = vpop.permute.xlu0 %420
        %422 = vrot.lane.b32.xlu0 %v403, 126
        %v423 = vpop.permute.xlu0 %422
        %424 = vrot.lane.b32.xlu0 %v404, 126
        %v425 = vpop.permute.xlu0 %424
        %426 = vrot.lane.b32.xlu0 %v405, 126
        %v427 = vpop.permute.xlu0 %426
        %428 = vrot.lane.b32.xlu0 %v406, 126
        %v429 = vpop.permute.xlu0 %428
        %430 = vrot.lane.b32.xlu0 %v407, 126
        %v431 = vpop.permute.xlu0 %430
        %v440 = vadd.f32 %v372, %v417
        %v441 = vadd.f32 %v373, %v419
        %v442 = vadd.f32 %v374, %v421
        %v443 = vadd.f32 %v375, %v423
        %v444 = vadd.f32 %v376, %v425
        %v445 = vadd.f32 %v377, %v427
        %v446 = vadd.f32 %v378, %v429
        %v447 = vadd.f32 %v379, %v431
        %v448 = vld [vmem:[#allocation2 + $0x1] sm:$0xff]
        %v449 = vld [vmem:[#allocation2 + $0x9] sm:$0xff]
        %v450 = vld [vmem:[#allocation2 + $0x19] sm:$0xff]
        %v451 = vld [vmem:[#allocation2 + $0x21] sm:$0xff]
        %v452 = vld [vmem:[#allocation2 + $0x31] sm:$0xff]
        %v453 = vld [vmem:[#allocation2 + $0x39] sm:$0xff]
        %v454 = vld [vmem:[#allocation2 + $0x49] sm:$0xff]
        %v455 = vld [vmem:[#allocation2 + $0x51] sm:$0xff]
        %v456 = vrot.slane %v268, 1
        %v457 = vrot.slane %v269, 1
        %v458 = vrot.slane %v270, 1
        %v459 = vrot.slane %v271, 1
        %s460 = vtos %v456
        %v461 = vstv %s460
        %s463 = vtos %v457
        %v464 = vstv %s463
        %s466 = vtos %v458
        %v467 = vstv %s466
        %s469 = vtos %v459
        %v470 = vstv %s469
        %v472 = vmul.f32 %v448, %v461
        %v473 = vmul.f32 %v449, %v461
        %v474 = vmul.f32 %v450, %v464
        %v475 = vmul.f32 %v451, %v464
        %v476 = vmul.f32 %v452, %v467
        %v477 = vmul.f32 %v453, %v467
        %v478 = vmul.f32 %v454, %v470
        %v479 = vmul.f32 %v455, %v470
        %v480 = vadd.f32 %v440, %v472
        %v481 = vadd.f32 %v441, %v473
        %v482 = vadd.f32 %v442, %v474
        %v483 = vadd.f32 %v443, %v475
        %v484 = vadd.f32 %v444, %v476
        %v485 = vadd.f32 %v445, %v477
        %v486 = vadd.f32 %v446, %v478
        %v487 = vadd.f32 %v447, %v479
        %488 = vrot.lane.b32.xlu0 %v456, 127
        %v489 = vpop.permute.xlu0 %488
        %490 = vrot.lane.b32.xlu0 %v457, 127
        %v491 = vpop.permute.xlu0 %490
        %492 = vrot.lane.b32.xlu0 %v458, 127
        %v493 = vpop.permute.xlu0 %492
        %494 = vrot.lane.b32.xlu0 %v459, 127
        %v495 = vpop.permute.xlu0 %494
        %s496 = vtos %v489
        %v497 = vstv %s496
        %s499 = vtos %v491
        %v500 = vstv %s499
        %s502 = vtos %v493
        %v503 = vstv %s502
        %s505 = vtos %v495
        %v506 = vstv %s505
        %v508 = vmul.f32 %v448, %v497
        %v509 = vmul.f32 %v449, %v497
        %v510 = vmul.f32 %v450, %v500
        %v511 = vmul.f32 %v451, %v500
        %v512 = vmul.f32 %v452, %v503
        %v513 = vmul.f32 %v453, %v503
        %v514 = vmul.f32 %v454, %v506
        %v515 = vmul.f32 %v455, %v506
        %524 = vrot.lane.b32.xlu0 %v508, 127
        %v525 = vpop.permute.xlu0 %524
        %526 = vrot.lane.b32.xlu0 %v509, 127
        %v527 = vpop.permute.xlu0 %526
        %528 = vrot.lane.b32.xlu0 %v510, 127
        %v529 = vpop.permute.xlu0 %528
        %530 = vrot.lane.b32.xlu0 %v511, 127
        %v531 = vpop.permute.xlu0 %530
        %532 = vrot.lane.b32.xlu0 %v512, 127
        %v533 = vpop.permute.xlu0 %532
        %534 = vrot.lane.b32.xlu0 %v513, 127
        %v535 = vpop.permute.xlu0 %534
        %536 = vrot.lane.b32.xlu0 %v514, 127
        %v537 = vpop.permute.xlu0 %536
        %538 = vrot.lane.b32.xlu0 %v515, 127
        %v539 = vpop.permute.xlu0 %538
        %v548 = vadd.f32 %v480, %v525
        %v549 = vadd.f32 %v481, %v527
        %v550 = vadd.f32 %v482, %v529
        %v551 = vadd.f32 %v483, %v531
        %v552 = vadd.f32 %v484, %v533
        %v553 = vadd.f32 %v485, %v535
        %v554 = vadd.f32 %v486, %v537
        %v555 = vadd.f32 %v487, %v539
        %556 = vrot.lane.b32.xlu0 %v456, 126
        %v557 = vpop.permute.xlu0 %556
        %558 = vrot.lane.b32.xlu0 %v457, 126
        %v559 = vpop.permute.xlu0 %558
        %560 = vrot.lane.b32.xlu0 %v458, 126
        %v561 = vpop.permute.xlu0 %560
        %562 = vrot.lane.b32.xlu0 %v459, 126
        %v563 = vpop.permute.xlu0 %562
        %s564 = vtos %v557
        %v565 = vstv %s564
        %s567 = vtos %v559
        %v568 = vstv %s567
        %s570 = vtos %v561
        %v571 = vstv %s570
        %s573 = vtos %v563
        %v574 = vstv %s573
        %v576 = vmul.f32 %v448, %v565
        %v577 = vmul.f32 %v449, %v565
        %v578 = vmul.f32 %v450, %v568
        %v579 = vmul.f32 %v451, %v568
        %v580 = vmul.f32 %v452, %v571
        %v581 = vmul.f32 %v453, %v571
        %v582 = vmul.f32 %v454, %v574
        %v583 = vmul.f32 %v455, %v574
        %592 = vrot.lane.b32.xlu0 %v576, 126
        %v593 = vpop.permute.xlu0 %592
        %594 = vrot.lane.b32.xlu0 %v577, 126
        %v595 = vpop.permute.xlu0 %594
        %596 = vrot.lane.b32.xlu0 %v578, 126
        %v597 = vpop.permute.xlu0 %596
        %598 = vrot.lane.b32.xlu0 %v579, 126
        %v599 = vpop.permute.xlu0 %598
        %600 = vrot.lane.b32.xlu0 %v580, 126
        %v601 = vpop.permute.xlu0 %600
        %602 = vrot.lane.b32.xlu0 %v581, 126
        %v603 = vpop.permute.xlu0 %602
        %604 = vrot.lane.b32.xlu0 %v582, 126
        %v605 = vpop.permute.xlu0 %604
        %606 = vrot.lane.b32.xlu0 %v583, 126
        %v607 = vpop.permute.xlu0 %606
        %v616 = vadd.f32 %v548, %v593
        %v617 = vadd.f32 %v549, %v595
        %v618 = vadd.f32 %v550, %v597
        %v619 = vadd.f32 %v551, %v599
        %v620 = vadd.f32 %v552, %v601
        %v621 = vadd.f32 %v553, %v603
        %v622 = vadd.f32 %v554, %v605
        %v623 = vadd.f32 %v555, %v607
        %v624 = vld [vmem:[#allocation2 + $0x2] sm:$0xff]
        %v625 = vld [vmem:[#allocation2 + $0xa] sm:$0xff]
        %v626 = vld [vmem:[#allocation2 + $0x1a] sm:$0xff]
        %v627 = vld [vmem:[#allocation2 + $0x22] sm:$0xff]
        %v628 = vld [vmem:[#allocation2 + $0x32] sm:$0xff]
        %v629 = vld [vmem:[#allocation2 + $0x3a] sm:$0xff]
        %v630 = vld [vmem:[#allocation2 + $0x4a] sm:$0xff]
        %v631 = vld [vmem:[#allocation2 + $0x52] sm:$0xff]
        %v632 = vrot.slane %v268, 2
        %v633 = vrot.slane %v269, 2
        %v634 = vrot.slane %v270, 2
        %v635 = vrot.slane %v271, 2
        %s636 = vtos %v632
        %v637 = vstv %s636
        %s639 = vtos %v633
        %v640 = vstv %s639
        %s642 = vtos %v634
        %v643 = vstv %s642
        %s645 = vtos %v635
        %v646 = vstv %s645
        %v648 = vmul.f32 %v624, %v637
        %v649 = vmul.f32 %v625, %v637
        %v650 = vmul.f32 %v626, %v640
        %v651 = vmul.f32 %v627, %v640
        %v652 = vmul.f32 %v628, %v643
        %v653 = vmul.f32 %v629, %v643
        %v654 = vmul.f32 %v630, %v646
        %v655 = vmul.f32 %v631, %v646
        %v656 = vadd.f32 %v616, %v648
        %v657 = vadd.f32 %v617, %v649
        %v658 = vadd.f32 %v618, %v650
        %v659 = vadd.f32 %v619, %v651
        %v660 = vadd.f32 %v620, %v652
        %v661 = vadd.f32 %v621, %v653
        %v662 = vadd.f32 %v622, %v654
        %v663 = vadd.f32 %v623, %v655
        %664 = vrot.lane.b32.xlu0 %v632, 127
        %v665 = vpop.permute.xlu0 %664
        %666 = vrot.lane.b32.xlu0 %v633, 127
        %v667 = vpop.permute.xlu0 %666
        %668 = vrot.lane.b32.xlu0 %v634, 127
        %v669 = vpop.permute.xlu0 %668
        %670 = vrot.lane.b32.xlu0 %v635, 127
        %v671 = vpop.permute.xlu0 %670
        %s672 = vtos %v665
        %v673 = vstv %s672
        %s675 = vtos %v667
        %v676 = vstv %s675
        %s678 = vtos %v669
        %v679 = vstv %s678
        %s681 = vtos %v671
        %v682 = vstv %s681
        %v684 = vmul.f32 %v624, %v673
        %v685 = vmul.f32 %v625, %v673
        %v686 = vmul.f32 %v626, %v676
        %v687 = vmul.f32 %v627, %v676
        %v688 = vmul.f32 %v628, %v679
        %v689 = vmul.f32 %v629, %v679
        %v690 = vmul.f32 %v630, %v682
        %v691 = vmul.f32 %v631, %v682
        %700 = vrot.lane.b32.xlu0 %v684, 127
        %v701 = vpop.permute.xlu0 %700
        %702 = vrot.lane.b32.xlu0 %v685, 127
        %v703 = vpop.permute.xlu0 %702
        %704 = vrot.lane.b32.xlu0 %v686, 127
        %v705 = vpop.permute.xlu0 %704
        %706 = vrot.lane.b32.xlu0 %v687, 127
        %v707 = vpop.permute.xlu0 %706
        %708 = vrot.lane.b32.xlu0 %v688, 127
        %v709 = vpop.permute.xlu0 %708
        %710 = vrot.lane.b32.xlu0 %v689, 127
        %v711 = vpop.permute.xlu0 %710
        %712 = vrot.lane.b32.xlu0 %v690, 127
        %v713 = vpop.permute.xlu0 %712
        %714 = vrot.lane.b32.xlu0 %v691, 127
        %v715 = vpop.permute.xlu0 %714
        %v724 = vadd.f32 %v656, %v701
        %v725 = vadd.f32 %v657, %v703
        %v726 = vadd.f32 %v658, %v705
        %v727 = vadd.f32 %v659, %v707
        %v728 = vadd.f32 %v660, %v709
        %v729 = vadd.f32 %v661, %v711
        %v730 = vadd.f32 %v662, %v713
        %v731 = vadd.f32 %v663, %v715
        %732 = vrot.lane.b32.xlu0 %v632, 126
        %v733 = vpop.permute.xlu0 %732
        %734 = vrot.lane.b32.xlu0 %v633, 126
        %v735 = vpop.permute.xlu0 %734
        %736 = vrot.lane.b32.xlu0 %v634, 126
        %v737 = vpop.permute.xlu0 %736
        %738 = vrot.lane.b32.xlu0 %v635, 126
        %v739 = vpop.permute.xlu0 %738
        %s740 = vtos %v733
        %v741 = vstv %s740
        %s743 = vtos %v735
        %v744 = vstv %s743
        %s746 = vtos %v737
        %v747 = vstv %s746
        %s749 = vtos %v739
        %v750 = vstv %s749
        %v752 = vmul.f32 %v624, %v741
        %v753 = vmul.f32 %v625, %v741
        %v754 = vmul.f32 %v626, %v744
        %v755 = vmul.f32 %v627, %v744
        %v756 = vmul.f32 %v628, %v747
        %v757 = vmul.f32 %v629, %v747
        %v758 = vmul.f32 %v630, %v750
        %v759 = vmul.f32 %v631, %v750
        %768 = vrot.lane.b32.xlu0 %v752, 126
        %v769 = vpop.permute.xlu0 %768
        %770 = vrot.lane.b32.xlu0 %v753, 126
        %v771 = vpop.permute.xlu0 %770
        %772 = vrot.lane.b32.xlu0 %v754, 126
        %v773 = vpop.permute.xlu0 %772
        %774 = vrot.lane.b32.xlu0 %v755, 126
        %v775 = vpop.permute.xlu0 %774
        %776 = vrot.lane.b32.xlu0 %v756, 126
        %v777 = vpop.permute.xlu0 %776
        %778 = vrot.lane.b32.xlu0 %v757, 126
        %v779 = vpop.permute.xlu0 %778
        %780 = vrot.lane.b32.xlu0 %v758, 126
        %v781 = vpop.permute.xlu0 %780
        %782 = vrot.lane.b32.xlu0 %v759, 126
        %v783 = vpop.permute.xlu0 %782
        %v792 = vadd.f32 %v724, %v769
        %v793 = vadd.f32 %v725, %v771
        %v794 = vadd.f32 %v726, %v773
        %v795 = vadd.f32 %v727, %v775
        %v796 = vadd.f32 %v728, %v777
        %v797 = vadd.f32 %v729, %v779
        %v798 = vadd.f32 %v730, %v781
        %v799 = vadd.f32 %v731, %v783
        %v800 = vmax.f32 %v792, 0.0
        %v801 = vmax.f32 %v793, 0.0
        %v802 = vmax.f32 %v794, 0.0
        %v803 = vmax.f32 %v795, 0.0
        %v804 = vmax.f32 %v796, 0.0
        %v805 = vmax.f32 %v797, 0.0
        %v806 = vmax.f32 %v798, 0.0
        %v807 = vmax.f32 %v799, 0.0
        %vm808 = vcmask 130048
        %809 = vst.msk [vmem:[%s196] sm:$0xff] %vm808, %v800
        %810 = vst.msk [vmem:[%s196 + $0x8] sm:$0xff] %vm808, %v801
        %811 = vst.msk [vmem:[%s196 + $0x10] sm:$0xff] %vm808, %v802
        %812 = vst.msk [vmem:[%s196 + $0x18] sm:$0xff] %vm808, %v803
        %813 = vst.msk [vmem:[%s196 + $0x20] sm:$0xff] %vm808, %v804
        %814 = vst.msk [vmem:[%s196 + $0x28] sm:$0xff] %vm808, %v805
        %815 = vst.msk [vmem:[%s196 + $0x30] sm:$0xff] %vm808, %v806
        %816 = vst.msk [vmem:[%s196 + $0x38] sm:$0xff] %vm808, %v807
        %s817 = sand.u32 %s95, 1
        %s818 = scalar_lea.sflag [#allocation5], %s817
        %s819 = sand.u32 %s95, 1
        %s820 = smul.addr %s819, 64
        %s821 = scalar_lea.vmem [#allocation6], %s820
        // Predicated region
        $region33: #{tpu_custom_call.1} parent=27 // pred_check
          %p822 = pneg %p105
        $region34: #{tpu_custom_call.1} parent=27 // pred_check_branch
          %824 = sbr.rel (%p822) target = $region36
        $region35: #{tpu_custom_call.1} parent=27 // pred_region
          %s825 = smul.u32 4, %s24
          %s827 = ssub.s32 1024, 1024
          %828 = vsyncadd %s818, %s827
          %s829 = smul.addr %s825, 2
          %s830 = smul.addr %s23, 8
          %s831 = sadd.s32 %s829, %s830
          %s832 = smul.addr %s831, 128
          %s833 = scalar_lea.hbm %s2, %s832
          %s834 = sshll.u32 %s821, 4
          %s835 = int_to_ptr.vmem [resolvable:$true] %s834
          %840 = dma.vmem_to_hbm [thread:$0]  %s835, 1024, %s833, %s818, 128, 128, 8
        $region36: #{tpu_custom_call.1} parent=27 // pred_fallthru
          _
      $region28: #{tpu_custom_call.1} parent=5 // pred_fallthru
        _
      %p841 = scmp.le.s32.totalorder 2, %s14
      // Predicated region
      $region37: #{tpu_custom_call.1} parent=5 // pred_check
        %p842 = pneg %p841
      $region38: #{tpu_custom_call.1} parent=5 // pred_check_branch
        %844 = sbr.rel (%p842) target = $region40
      $region39: #{tpu_custom_call.1} parent=5 // pred_region
        %s845 = ssub.s32 %s14, 2
        // Predicated region
        $region41: #{tpu_custom_call.1} parent=39 // pred_check
          %p846 = pneg %p111
        $region42: #{tpu_custom_call.1} parent=39 // pred_check_branch
          %848 = sbr.rel (%p846) target = $region44
        $region43: #{tpu_custom_call.1} parent=39 // pred_region
          %s849 = sand.u32 %s96, 1
          %s850 = scalar_lea.sflag [#allocation5], %s849
          %s851 = sand.u32 %s96, 1
          %s852 = smul.addr %s851, 64
          %s853 = scalar_lea.vmem [#allocation6], %s852
          %854 = dma.done %s850, 1024
        $region44: #{tpu_custom_call.1} parent=39 // pred_fallthru
          _
      $region40: #{tpu_custom_call.1} parent=5 // pred_fallthru
        _
    $region6: #{tpu_custom_call.1} parent=1 // loop_footer
      %s18 = sadd.s32 1, %s14
    $region7: #{tpu_custom_call.1} parent=1 // loop_footer_branch
      %13 = sbr.rel target = $region3
    $region8: #{tpu_custom_call.1} parent=1 // loop_exit
      _
    %855 = vsyncpa [#allocation4], 1
    %s856 = scalar_lea.sflag [#allocation4], 1
    %857 = vsyncpa %s856, 1
    %858 = vsyncpa [#allocation5], 1
    %s859 = scalar_lea.sflag [#allocation5], 1
    %860 = vsyncpa %s859, 1

</llo_original>
